<compile_context>
chip_gen: v7x
topology: tpu7x:2x2x1
jax: 0.10.0
libtpu: 0.0.40
codegen_flags: <defaults>
</compile_context>

<pallas_src>
import functools
import math

import jax
import jax.numpy as jnp
from jax import lax
from jax.experimental import pallas as pl
from jax.experimental.pallas import tpu as pltpu


def _gelu_exact(x):
    # nn.GELU() default: 0.5*x*(1+erf(x/sqrt(2))).  erf via Abramowitz-Stegun
    # 7.1.26 (|abs err| < 1.5e-7): only abs/mul/add/div/exp/select on the VPU
    # and EUP, no reliance on a lax.erf lowering inside Mosaic.
    z = x * (1.0 / math.sqrt(2.0))
    az = jnp.abs(z)
    t = 1.0 / (1.0 + 0.3275911 * az)
    poly = ((((1.061405429 * t - 1.453152027) * t + 1.421413741) * t
             - 0.284496736) * t + 0.254829592) * t
    erf_abs = 1.0 - poly * jnp.exp(-az * az)
    erf = jnp.where(z < 0.0, -erf_abs, erf_abs)
    return 0.5 * x * (1.0 + erf)


def _ccm_kernel(xm_ref, xt_ref, xb_ref, w1_ref, b1_ref, w2_ref, b2_ref,
                o_ref, slab_ref, *, width):
    # xm_ref  : (C, M)      M = TH*W, flat unpadded rows of this tile (stride W)
    # xt_ref  : (C, 8, W)   8 unpadded rows whose last row is the row above the tile
    # xb_ref  : (C, 8, W)   8 unpadded rows whose first row is the row below the tile
    # w1_ref  : (HID, 9*C)  3x3 weights, column order (ky*3+kx)*C + c
    # b1_ref  : (HID, 1)
    # w2_ref  : (C, HID)    1x1 weights
    # b2_ref  : (C, 1)
    # o_ref   : (C, M)      flat unpadded output rows (lane-dense)
    # slab_ref: (9*C, M)    im2col VMEM scratch
    c, m = o_ref.shape
    w = width
    t = pl.program_id(1)
    n_t = pl.num_programs(1)

    # Halo rows; zeroed when the tile touches the image top / bottom edge.
    top = xt_ref[:, 7, :] * (t > 0).astype(jnp.float32)
    bot = xb_ref[:, 0, :] * (t < n_t - 1).astype(jnp.float32)

    # Flat window with row stride W: tap (ky, kx) of output position p is
    # fw[:, p + ky*w + kx].  The single zero columns at both ends absorb the
    # corner reads of the first / last output position.
    fw = jnp.concatenate(
        [jnp.zeros((c, 1), jnp.float32), top, xm_ref[...], bot,
         jnp.zeros((c, 1), jnp.float32)], axis=1)

    # Width-edge masks: with row stride W (no padded columns), kx=0 taps of
    # column-0 outputs and kx=2 taps of column-(W-1) outputs would wrap into
    # the neighbouring row; zero them instead (that is exactly where the
    # conv's zero padding lives).  Column index is computed exactly in f32
    # (M < 2**22, so all integers and the +0.5 trick are exact).
    pos = lax.broadcasted_iota(jnp.int32, (1, m), 1).astype(jnp.float32)
    row = jnp.floor((pos + 0.5) / float(w))
    col = pos - row * float(w)
    not_left = col != 0.0
    not_right = col != float(w - 1)

    def tap(ti):
        ky, kx = ti // 3, ti % 3
        s = fw[:, ky * w + kx: ky * w + kx + m]
        if kx == 0:
            s = jnp.where(not_left, s, 0.0)
        elif kx == 2:
            s = jnp.where(not_right, s, 0.0)
        return s

    # im2col slab: taps are written in pairs as (2*C, M) values so that (for
    # C=4) every store is a full-sublane, unmasked vst (single vst slot on
    # v5e); the last tap is the only partial store.
    for i in range(4):
        slab_ref[2 * c * i: 2 * c * (i + 1), :] = jnp.concatenate(
            [tap(2 * i), tap(2 * i + 1)], axis=0)
    slab_ref[8 * c: 9 * c, :] = tap(8)

    # conv1 (3x3) as one K = 9*C MXU matmul, f32 accumulation and f32 passes.
    h = jnp.dot(w1_ref[...], slab_ref[...],
                preferred_element_type=jnp.float32,
                precision=lax.Precision.HIGHEST)
    h = _gelu_exact(h + b1_ref[...])

    # conv2 (1x1): (C, HID) @ (HID, M).
    y = jnp.dot(w2_ref[...], h, preferred_element_type=jnp.float32,
                precision=lax.Precision.HIGHEST)
    o_ref[...] = (y + b2_ref[...]).astype(o_ref.dtype)


def _vmem_step_bytes(C, th, W, hid):
    """Rough per-grid-step VMEM working set (bytes, f32, sublane-padded)."""
    m = th * W
    csub = max(8, C)
    return 4 * (
        2 * csub * m            # double-buffered main input block
        + 2 * csub * m          # double-buffered output block
        + 2 * 2 * C * 8 * W     # two double-buffered 8-row halo blocks
        + (9 * C + 8) * m       # im2col slab scratch
        + csub * (m + 2 * W)    # flat-window temporary
        + max(8, hid) * m       # conv1 activation
        + 2 * csub * m          # masked-slice temporaries / headroom
    )


def _vmem_budget_and_limit():
    try:
        cap = int(pltpu.get_tpu_info().vmem_capacity_bytes)
    except Exception:
        cap = 64 * 1024 * 1024  # conservative: v7x per-TensorCore VMEM
    budget = max(8 << 20, min(int(cap * 0.35), 48 << 20))
    limit = min(int(cap * 0.75), 112 << 20)
    return budget, limit


def _pick_tile_h(B, C, H, W, hid, budget):
    cands = [th for th in range(8, H + 1, 8)
             if H % th == 0 and (th * W) % 128 == 0]
    if B == 1 and H > 8:
        # Keep >= 2 row tiles so both v7x TensorCores get grid steps.
        two_plus = [th for th in cands if H // th >= 2]
        cands = two_plus or cands
    if not cands:
        # TODO(synk): ragged / unaligned row tiling for awkward (H, W);
        # fall back to one full-extent block per image (always layout-legal).
        return H
    best = cands[0]
    for th in cands:
        if _vmem_step_bytes(C, th, W, hid) <= budget:
            best = th
    return best


def ccm_pallas(x_nchw, w1_oihw, b1, w2_oihw, b2, tile_h=None):
    """CCM forward. x_nchw: (B, C, H, W) float32. Returns (B, C, H, W)."""
    B, C, H, W = x_nchw.shape
    HID = w1_oihw.shape[0]
    assert H % 8 == 0, "this kernel requires H % 8 == 0"
    # TODO(synk): support H not divisible by 8 (ragged last row tile).

    budget, vmem_limit = _vmem_budget_and_limit()
    TH = _pick_tile_h(B, C, H, W, HID, budget) if tile_h is None else tile_h
    assert H % TH == 0 and TH % 8 == 0
    assert (TH * W) % 128 == 0 or TH == H
    n_th = H // TH
    M = TH * W
    assert M < (1 << 22), "row tile too large for exact f32 column-index math"

    # Free, layout-preserving flat view: channels stay in sublanes, the flat
    # H*W spatial index becomes the lane dimension of every block.
    x_flat = x_nchw.reshape(B, C, H * W)

    # Conv weights -> matmul-friendly layouts (tiny, one-time).
    w1 = jnp.transpose(w1_oihw, (0, 2, 3, 1)).reshape(HID, 9 * C)
    w2 = w2_oihw[:, :, 0, 0]          # (C, HID)
    b1_col = b1.reshape(HID, 1)
    b2_col = b2.reshape(C, 1)

    kernel = functools.partial(_ccm_kernel, width=W)
    hb = TH // 8  # halo block-index stride (halo blocks are 8 rows tall)

    cost = pl.CostEstimate(
        flops=2 * B * H * W * (9 * C * HID + HID * C),
        transcendentals=B * H * W * HID,
        bytes_accessed=4 * (2 * B * C * H * W + w1.size + w2.size + HID + C))

    out_flat = pl.pallas_call(
        kernel,
        out_shape=jax.ShapeDtypeStruct((B, C, H * W), x_nchw.dtype),
        grid_spec=pltpu.PrefetchScalarGridSpec(
            num_scalar_prefetch=0,
            grid=(B, n_th),
            in_specs=[
                # Main rows of the tile, flat & lane-dense.
                pl.BlockSpec((pl.Squeezed(), C, M), lambda b, t: (b, 0, t)),
                # 8-row block ending at the row above the tile (clamped).
                pl.BlockSpec((pl.Squeezed(), C, 8, W),
                             lambda b, t: (b, 0, jnp.maximum(t * hb - 1, 0), 0)),
                # 8-row block starting at the row below the tile (clamped).
                pl.BlockSpec((pl.Squeezed(), C, 8, W),
                             lambda b, t: (b, 0,
                                           jnp.minimum((t + 1) * hb, H // 8 - 1),
                                           0)),
                pl.BlockSpec((HID, 9 * C), lambda b, t: (0, 0)),
                pl.BlockSpec((HID, 1), lambda b, t: (0, 0)),
                pl.BlockSpec((C, HID), lambda b, t: (0, 0)),
                pl.BlockSpec((C, 1), lambda b, t: (0, 0)),
            ],
            out_specs=pl.BlockSpec((pl.Squeezed(), C, M),
                                   lambda b, t: (b, 0, t)),
            scratch_shapes=[pltpu.VMEM((9 * C, M), jnp.float32)],
        ),
        compiler_params=pltpu.CompilerParams(
            dimension_semantics=("parallel", "parallel"),
            vmem_limit_bytes=vmem_limit),
        cost_estimate=cost,
    )(x_flat, x_nchw, x_nchw, w1, b1_col, w2, b2_col)

    return out_flat.reshape(B, C, H, W)


def ccm_reference(x_nchw, w1_oihw, b1, w2_oihw, b2):
    """Plain-JAX reference mirroring the PyTorch module."""
    dn = ("NCHW", "OIHW", "NCHW")
    y = lax.conv_general_dilated(x_nchw, w1_oihw, (1, 1), ((1, 1), (1, 1)),
                                 dimension_numbers=dn,
                                 precision=lax.Precision.HIGHEST)
    y = y + b1[None, :, None, None]
    y = jax.nn.gelu(y, approximate=False)
    y = lax.conv_general_dilated(y, w2_oihw, (1, 1), ((0, 0), (0, 0)),
                                 dimension_numbers=dn,
                                 precision=lax.Precision.HIGHEST)
    return y + b2[None, :, None, None]


if __name__ == "__main__":
    # Small shapes consistent with CCM(dim=4, growth_rate=2.0).
    B, C, H, W = 2, 4, 16, 16
    growth_rate = 2.0
    HID = int(C * growth_rate)

    key = jax.random.PRNGKey(0)
    kx_, kw1, kb1, kw2, kb2 = jax.random.split(key, 5)

    x = jax.random.normal(kx_, (B, C, H, W), dtype=jnp.float32)
    w1 = 0.1 * jax.random.normal(kw1, (HID, C, 3, 3), dtype=jnp.float32)
    b1 = 0.1 * jax.random.normal(kb1, (HID,), dtype=jnp.float32)
    w2 = 0.1 * jax.random.normal(kw2, (C, HID, 1, 1), dtype=jnp.float32)
    b2 = 0.1 * jax.random.normal(kb2, (C,), dtype=jnp.float32)

    ref = jax.block_until_ready(ccm_reference(x, w1, b1, w2, b2))

    ccm_jit = jax.jit(ccm_pallas, static_argnames=("tile_h",))

    # Auto-picked tile (single row tile per image) and an explicit smaller
    # tile that exercises the multi-tile + halo path.
    for th in (None, 8):
        out = jax.block_until_ready(ccm_jit(x, w1, b1, w2, b2, tile_h=th))
        assert out.shape == (B, C, H, W)
        err = float(jnp.max(jnp.abs(out - ref)))
        assert jnp.allclose(out, ref, atol=1e-4, rtol=1e-4), err

    print("KERNEL_OK")
</pallas_src>

<mosaic_0001>
module attributes {stable_mosaic.version = 11 : i64} {
  func.func @_ccm_kernel(%arg0: i32, %arg1: i32, %arg2: memref<1x4x256xf32, #tpu.memory_space<vmem>>, %arg3: memref<1x4x8x16xf32, #tpu.memory_space<vmem>>, %arg4: memref<1x4x8x16xf32, #tpu.memory_space<vmem>>, %arg5: memref<8x36xf32, #tpu.memory_space<vmem>>, %arg6: memref<8x1xf32, #tpu.memory_space<vmem>>, %arg7: memref<4x8xf32, #tpu.memory_space<vmem>>, %arg8: memref<4x1xf32, #tpu.memory_space<vmem>>, %arg9: memref<1x4x256xf32, #tpu.memory_space<vmem>>, %arg10: memref<36x256xf32, #tpu.memory_space<vmem>>) attributes {dimension_semantics = [#tpu.dimension_semantics<parallel>, #tpu.dimension_semantics<parallel>], iteration_bounds = array<i64: 2, 1>, scalar_prefetch = 0 : i64, scratch_operands = 1 : i64, tpu.core_type = #tpu.core_type<tc>, window_params = [{transform_indices = @transform_0, window_bounds = array<i64: 1, 4, 256>}, {transform_indices = @transform_1, window_bounds = array<i64: 1, 4, 8, 16>}, {transform_indices = @transform_2, window_bounds = array<i64: 1, 4, 8, 16>}, {pipeline_mode = #tpu.pipeline_mode<synchronous>, transform_indices = @transform_3, window_bounds = array<i64: 8, 36>}, {pipeline_mode = #tpu.pipeline_mode<synchronous>, transform_indices = @transform_4, window_bounds = array<i64: 8, 1>}, {pipeline_mode = #tpu.pipeline_mode<synchronous>, transform_indices = @transform_5, window_bounds = array<i64: 4, 8>}, {pipeline_mode = #tpu.pipeline_mode<synchronous>, transform_indices = @transform_6, window_bounds = array<i64: 4, 1>}, {transform_indices = @transform_7, window_bounds = array<i64: 1, 4, 256>}]} {
    %c0 = arith.constant 0 : index
    %c0_0 = arith.constant 0 : index
    %c7 = arith.constant 7 : index
    %c0_1 = arith.constant 0 : index
    %0 = vector.load %arg3[%c0, %c0_0, %c7, %c0_1] : memref<1x4x8x16xf32, #tpu.memory_space<vmem>>, vector<1x4x1x16xf32>
    %1 = vector.shape_cast %0 : vector<1x4x1x16xf32> to vector<4x16xf32>
    %c0_i32 = arith.constant 0 : i32
    %2 = arith.cmpi sgt, %arg1, %c0_i32 : i32
    %3 = arith.extui %2 : i1 to i32
    %4 = arith.sitofp %3 : i32 to f32
    %5 = vector.broadcast %4 : f32 to vector<4x16xf32>
    %6 = arith.mulf %1, %5 : vector<4x16xf32>
    %c0_2 = arith.constant 0 : index
    %c0_3 = arith.constant 0 : index
    %c0_4 = arith.constant 0 : index
    %c0_5 = arith.constant 0 : index
    %7 = vector.load %arg4[%c0_2, %c0_3, %c0_4, %c0_5] : memref<1x4x8x16xf32, #tpu.memory_space<vmem>>, vector<1x4x1x16xf32>
    %8 = vector.shape_cast %7 : vector<1x4x1x16xf32> to vector<4x16xf32>
    %c0_i32_6 = arith.constant 0 : i32
    %9 = arith.cmpi slt, %arg1, %c0_i32_6 : i32
    %10 = arith.extui %9 : i1 to i32
    %11 = arith.sitofp %10 : i32 to f32
    %12 = vector.broadcast %11 : f32 to vector<4x16xf32>
    %13 = arith.mulf %8, %12 : vector<4x16xf32>
    %cst = arith.constant 0.000000e+00 : f32
    %14 = vector.broadcast %cst : f32 to vector<4x1xf32>
    %c0_7 = arith.constant 0 : index
    %c0_8 = arith.constant 0 : index
    %c0_9 = arith.constant 0 : index
    %15 = vector.load %arg2[%c0_7, %c0_8, %c0_9] : memref<1x4x256xf32, #tpu.memory_space<vmem>>, vector<1x4x256xf32>
    %16 = vector.shape_cast %15 : vector<1x4x256xf32> to vector<4x256xf32>
    %cst_10 = arith.constant 0.000000e+00 : f32
    %17 = vector.broadcast %cst_10 : f32 to vector<4x1xf32>
    %18 = tpu.concatenate %14, %6, %16, %13, %17 in 1 : vector<4x1xf32>, vector<4x16xf32>, vector<4x256xf32>, vector<4x16xf32>, vector<4x1xf32> -> vector<4x290xf32>
    %19 = tpu.iota {dimensions = array<i32: 1>} : vector<1x256xi32>
    %20 = arith.sitofp %19 : vector<1x256xi32> to vector<1x256xf32>
    %cst_11 = arith.constant 5.000000e-01 : f32
    %21 = vector.broadcast %cst_11 : f32 to vector<1x256xf32>
    %22 = arith.addf %20, %21 : vector<1x256xf32>
    %cst_12 = arith.constant 1.600000e+01 : f32
    %23 = vector.broadcast %cst_12 : f32 to vector<1x256xf32>
    %24 = arith.divf %22, %23 : vector<1x256xf32>
    %25 = math.floor %24 : vector<1x256xf32>
    %cst_13 = arith.constant 1.600000e+01 : f32
    %26 = vector.broadcast %cst_13 : f32 to vector<1x256xf32>
    %27 = arith.mulf %25, %26 : vector<1x256xf32>
    %28 = arith.subf %20, %27 : vector<1x256xf32>
    %cst_14 = arith.constant 0.000000e+00 : f32
    %29 = vector.broadcast %cst_14 : f32 to vector<1x256xf32>
    %30 = arith.cmpf one, %28, %29 : vector<1x256xf32>
    %cst_15 = arith.constant 1.500000e+01 : f32
    %31 = vector.broadcast %cst_15 : f32 to vector<1x256xf32>
    %32 = arith.cmpf one, %28, %31 : vector<1x256xf32>
    %33 = vector.extract_strided_slice %18 {offsets = [0, 0], sizes = [4, 256], strides = [1, 1]} : vector<4x290xf32> to vector<4x256xf32>
    %cst_16 = arith.constant 0.000000e+00 : f32
    %34 = vector.shape_cast %30 : vector<1x256xi1> to vector<1x256xi1>
    %35 = vector.broadcast %34 : vector<1x256xi1> to vector<4x256xi1>
    %36 = vector.broadcast %cst_16 : f32 to vector<4x256xf32>
    %37 = arith.select %35, %33, %36 : vector<4x256xi1>, vector<4x256xf32>
    %38 = vector.extract_strided_slice %18 {offsets = [0, 1], sizes = [4, 256], strides = [1, 1]} : vector<4x290xf32> to vector<4x256xf32>
    %39 = tpu.concatenate %37, %38 in 0 : vector<4x256xf32>, vector<4x256xf32> -> vector<8x256xf32>
    %c0_17 = arith.constant 0 : index
    %c0_18 = arith.constant 0 : index
    %40 = vector.load %arg10[%c0_17, %c0_18] : memref<36x256xf32, #tpu.memory_space<vmem>>, vector<8x256xf32>
    tpu.vector_store %arg10[%c0_17, %c0_18], %39 {strides = array<i32>} : memref<36x256xf32, #tpu.memory_space<vmem>>, vector<8x256xf32>,
    %41 = vector.extract_strided_slice %18 {offsets = [0, 2], sizes = [4, 256], strides = [1, 1]} : vector<4x290xf32> to vector<4x256xf32>
    %cst_19 = arith.constant 0.000000e+00 : f32
    %42 = vector.shape_cast %32 : vector<1x256xi1> to vector<1x256xi1>
    %43 = vector.broadcast %42 : vector<1x256xi1> to vector<4x256xi1>
    %44 = vector.broadcast %cst_19 : f32 to vector<4x256xf32>
    %45 = arith.select %43, %41, %44 : vector<4x256xi1>, vector<4x256xf32>
    %46 = vector.extract_strided_slice %18 {offsets = [0, 16], sizes = [4, 256], strides = [1, 1]} : vector<4x290xf32> to vector<4x256xf32>
    %cst_20 = arith.constant 0.000000e+00 : f32
    %47 = vector.shape_cast %30 : vector<1x256xi1> to vector<1x256xi1>
    %48 = vector.broadcast %47 : vector<1x256xi1> to vector<4x256xi1>
    %49 = vector.broadcast %cst_20 : f32 to vector<4x256xf32>
    %50 = arith.select %48, %46, %49 : vector<4x256xi1>, vector<4x256xf32>
    %51 = tpu.concatenate %45, %50 in 0 : vector<4x256xf32>, vector<4x256xf32> -> vector<8x256xf32>
    %c8 = arith.constant 8 : index
    %c0_21 = arith.constant 0 : index
    %52 = vector.load %arg10[%c8, %c0_21] : memref<36x256xf32, #tpu.memory_space<vmem>>, vector<8x256xf32>
    tpu.vector_store %arg10[%c8, %c0_21], %51 {strides = array<i32>} : memref<36x256xf32, #tpu.memory_space<vmem>>, vector<8x256xf32>,
    %53 = vector.extract_strided_slice %18 {offsets = [0, 17], sizes = [4, 256], strides = [1, 1]} : vector<4x290xf32> to vector<4x256xf32>
    %54 = vector.extract_strided_slice %18 {offsets = [0, 18], sizes = [4, 256], strides = [1, 1]} : vector<4x290xf32> to vector<4x256xf32>
    %cst_22 = arith.constant 0.000000e+00 : f32
    %55 = vector.shape_cast %32 : vector<1x256xi1> to vector<1x256xi1>
    %56 = vector.broadcast %55 : vector<1x256xi1> to vector<4x256xi1>
    %57 = vector.broadcast %cst_22 : f32 to vector<4x256xf32>
    %58 = arith.select %56, %54, %57 : vector<4x256xi1>, vector<4x256xf32>
    %59 = tpu.concatenate %53, %58 in 0 : vector<4x256xf32>, vector<4x256xf32> -> vector<8x256xf32>
    %c16 = arith.constant 16 : index
    %c0_23 = arith.constant 0 : index
    %60 = vector.load %arg10[%c16, %c0_23] : memref<36x256xf32, #tpu.memory_space<vmem>>, vector<8x256xf32>
    tpu.vector_store %arg10[%c16, %c0_23], %59 {strides = array<i32>} : memref<36x256xf32, #tpu.memory_space<vmem>>, vector<8x256xf32>,
    %61 = vector.extract_strided_slice %18 {offsets = [0, 32], sizes = [4, 256], strides = [1, 1]} : vector<4x290xf32> to vector<4x256xf32>
    %cst_24 = arith.constant 0.000000e+00 : f32
    %62 = vector.shape_cast %30 : vector<1x256xi1> to vector<1x256xi1>
    %63 = vector.broadcast %62 : vector<1x256xi1> to vector<4x256xi1>
    %64 = vector.broadcast %cst_24 : f32 to vector<4x256xf32>
    %65 = arith.select %63, %61, %64 : vector<4x256xi1>, vector<4x256xf32>
    %66 = vector.extract_strided_slice %18 {offsets = [0, 33], sizes = [4, 256], strides = [1, 1]} : vector<4x290xf32> to vector<4x256xf32>
    %67 = tpu.concatenate %65, %66 in 0 : vector<4x256xf32>, vector<4x256xf32> -> vector<8x256xf32>
    %c24 = arith.constant 24 : index
    %c0_25 = arith.constant 0 : index
    %68 = vector.load %arg10[%c24, %c0_25] : memref<36x256xf32, #tpu.memory_space<vmem>>, vector<8x256xf32>
    tpu.vector_store %arg10[%c24, %c0_25], %67 {strides = array<i32>} : memref<36x256xf32, #tpu.memory_space<vmem>>, vector<8x256xf32>,
    %69 = vector.extract_strided_slice %18 {offsets = [0, 34], sizes = [4, 256], strides = [1, 1]} : vector<4x290xf32> to vector<4x256xf32>
    %cst_26 = arith.constant 0.000000e+00 : f32
    %70 = vector.shape_cast %32 : vector<1x256xi1> to vector<1x256xi1>
    %71 = vector.broadcast %70 : vector<1x256xi1> to vector<4x256xi1>
    %72 = vector.broadcast %cst_26 : f32 to vector<4x256xf32>
    %73 = arith.select %71, %69, %72 : vector<4x256xi1>, vector<4x256xf32>
    %c32 = arith.constant 32 : index
    %c0_27 = arith.constant 0 : index
    %74 = vector.load %arg10[%c32, %c0_27] : memref<36x256xf32, #tpu.memory_space<vmem>>, vector<4x256xf32>
    tpu.vector_store %arg10[%c32, %c0_27], %73 {strides = array<i32>} : memref<36x256xf32, #tpu.memory_space<vmem>>, vector<4x256xf32>,
    %c0_28 = arith.constant 0 : index
    %c0_29 = arith.constant 0 : index
    %75 = vector.load %arg5[%c0_28, %c0_29] : memref<8x36xf32, #tpu.memory_space<vmem>>, vector<8x36xf32>
    %c0_30 = arith.constant 0 : index
    %c0_31 = arith.constant 0 : index
    %76 = vector.load %arg10[%c0_30, %c0_31] : memref<36x256xf32, #tpu.memory_space<vmem>>, vector<36x256xf32>
    %cst_32 = arith.constant dense<0.000000e+00> : vector<8x256xf32>
    %77 = tpu.matmul %75, %76, %cst_32 {dimension_numbers = #tpu.dot_dimension_numbers<[1], [0], [0], [1], [0, 0, 1, 1], [], []>, precision = #tpu.contract_precision<fp32>} : vector<8x36xf32>, vector<36x256xf32>, vector<8x256xf32> -> vector<8x256xf32>
    %c0_33 = arith.constant 0 : index
    %c0_34 = arith.constant 0 : index
    %78 = vector.load %arg6[%c0_33, %c0_34] : memref<8x1xf32, #tpu.memory_space<vmem>>, vector<8x1xf32>
    %79 = vector.broadcast %78 : vector<8x1xf32> to vector<8x256xf32>
    %80 = arith.addf %77, %79 : vector<8x256xf32>
    %cst_35 = arith.constant 0.707106769 : f32
    %81 = vector.broadcast %cst_35 : f32 to vector<8x256xf32>
    %82 = arith.mulf %80, %81 : vector<8x256xf32>
    %83 = math.absf %82 : vector<8x256xf32>
    %cst_36 = arith.constant 0.327591091 : f32
    %84 = vector.broadcast %cst_36 : f32 to vector<8x256xf32>
    %85 = arith.mulf %84, %83 : vector<8x256xf32>
    %cst_37 = arith.constant 1.000000e+00 : f32
    %86 = vector.broadcast %cst_37 : f32 to vector<8x256xf32>
    %87 = arith.addf %86, %85 : vector<8x256xf32>
    %cst_38 = arith.constant 1.000000e+00 : f32
    %88 = vector.broadcast %cst_38 : f32 to vector<8x256xf32>
    %89 = arith.divf %88, %87 : vector<8x256xf32>
    %cst_39 = arith.constant 1.06140542 : f32
    %90 = vector.broadcast %cst_39 : f32 to vector<8x256xf32>
    %91 = arith.mulf %90, %89 : vector<8x256xf32>
    %cst_40 = arith.constant 1.45315206 : f32
    %92 = vector.broadcast %cst_40 : f32 to vector<8x256xf32>
    %93 = arith.subf %91, %92 : vector<8x256xf32>
    %94 = arith.mulf %93, %89 : vector<8x256xf32>
    %cst_41 = arith.constant 1.42141378 : f32
    %95 = vector.broadcast %cst_41 : f32 to vector<8x256xf32>
    %96 = arith.addf %94, %95 : vector<8x256xf32>
    %97 = arith.mulf %96, %89 : vector<8x256xf32>
    %cst_42 = arith.constant 0.284496725 : f32
    %98 = vector.broadcast %cst_42 : f32 to vector<8x256xf32>
    %99 = arith.subf %97, %98 : vector<8x256xf32>
    %100 = arith.mulf %99, %89 : vector<8x256xf32>
    %cst_43 = arith.constant 0.254829586 : f32
    %101 = vector.broadcast %cst_43 : f32 to vector<8x256xf32>
    %102 = arith.addf %100, %101 : vector<8x256xf32>
    %103 = arith.mulf %102, %89 : vector<8x256xf32>
    %cst_44 = arith.constant 0.000000e+00 : f32
    %104 = vector.broadcast %cst_44 : f32 to vector<8x256xf32>
    %105 = arith.subf %104, %83 : vector<8x256xf32>
    %106 = arith.mulf %105, %83 : vector<8x256xf32>
    %107 = math.exp %106 : vector<8x256xf32>
    %108 = arith.mulf %103, %107 : vector<8x256xf32>
    %cst_45 = arith.constant 1.000000e+00 : f32
    %109 = vector.broadcast %cst_45 : f32 to vector<8x256xf32>
    %110 = arith.subf %109, %108 : vector<8x256xf32>
    %cst_46 = arith.constant 0.000000e+00 : f32
    %111 = vector.broadcast %cst_46 : f32 to vector<8x256xf32>
    %112 = arith.cmpf olt, %82, %111 : vector<8x256xf32>
    %cst_47 = arith.constant 0.000000e+00 : f32
    %113 = vector.broadcast %cst_47 : f32 to vector<8x256xf32>
    %114 = arith.subf %113, %110 : vector<8x256xf32>
    %115 = arith.select %112, %114, %110 : vector<8x256xi1>, vector<8x256xf32>
    %cst_48 = arith.constant 5.000000e-01 : f32
    %116 = vector.broadcast %cst_48 : f32 to vector<8x256xf32>
    %117 = arith.mulf %116, %80 : vector<8x256xf32>
    %cst_49 = arith.constant 1.000000e+00 : f32
    %118 = vector.broadcast %cst_49 : f32 to vector<8x256xf32>
    %119 = arith.addf %118, %115 : vector<8x256xf32>
    %120 = arith.mulf %117, %119 : vector<8x256xf32>
    %c0_50 = arith.constant 0 : index
    %c0_51 = arith.constant 0 : index
    %121 = vector.load %arg7[%c0_50, %c0_51] : memref<4x8xf32, #tpu.memory_space<vmem>>, vector<4x8xf32>
    %cst_52 = arith.constant dense<0.000000e+00> : vector<4x256xf32>
    %122 = tpu.matmul %121, %120, %cst_52 {dimension_numbers = #tpu.dot_dimension_numbers<[1], [0], [0], [1], [0, 0, 1, 1], [], []>, precision = #tpu.contract_precision<fp32>} : vector<4x8xf32>, vector<8x256xf32>, vector<4x256xf32> -> vector<4x256xf32>
    %c0_53 = arith.constant 0 : index
    %c0_54 = arith.constant 0 : index
    %123 = vector.load %arg8[%c0_53, %c0_54] : memref<4x1xf32, #tpu.memory_space<vmem>>, vector<4x1xf32>
    %124 = vector.broadcast %123 : vector<4x1xf32> to vector<4x256xf32>
    %125 = arith.addf %122, %124 : vector<4x256xf32>
    %c0_55 = arith.constant 0 : index
    %c0_56 = arith.constant 0 : index
    %c0_57 = arith.constant 0 : index
    %126 = vector.load %arg9[%c0_55, %c0_56, %c0_57] : memref<1x4x256xf32, #tpu.memory_space<vmem>>, vector<1x4x256xf32>
    %127 = vector.shape_cast %126 : vector<1x4x256xf32> to vector<4x256xf32>
    %128 = vector.shape_cast %125 : vector<4x256xf32> to vector<1x4x256xf32>
    tpu.vector_store %arg9[%c0_55, %c0_56, %c0_57], %128 {strides = array<i32>} : memref<1x4x256xf32, #tpu.memory_space<vmem>>, vector<1x4x256xf32>,
    return
  }
  func.func @transform_0(%arg0: i32, %arg1: i32) -> (i32, i32, i32) {
    %c0_i32 = arith.constant 0 : i32
    %c0_i32_0 = arith.constant 0 : i32
    return %arg0, %c0_i32, %arg1 : i32, i32, i32
  }
  func.func @transform_1(%arg0: i32, %arg1: i32) -> (i32, i32, i32, i32) {
    %c2_i32 = arith.constant 2 : i32
    %0 = arith.muli %arg1, %c2_i32 : i32
    %c1_i32 = arith.constant 1 : i32
    %1 = arith.subi %0, %c1_i32 : i32
    %c0_i32 = arith.constant 0 : i32
    %2 = arith.maxsi %1, %c0_i32 : i32
    %c0_i32_0 = arith.constant 0 : i32
    %c0_i32_1 = arith.constant 0 : i32
    %c0_i32_2 = arith.constant 0 : i32
    return %arg0, %c0_i32_0, %2, %c0_i32_1 : i32, i32, i32, i32
  }
  func.func @transform_2(%arg0: i32, %arg1: i32) -> (i32, i32, i32, i32) {
    %c1_i32 = arith.constant 1 : i32
    %0 = arith.addi %arg1, %c1_i32 : i32
    %c2_i32 = arith.constant 2 : i32
    %1 = arith.muli %0, %c2_i32 : i32
    %c1_i32_0 = arith.constant 1 : i32
    %2 = arith.minsi %1, %c1_i32_0 : i32
    %c0_i32 = arith.constant 0 : i32
    %c0_i32_1 = arith.constant 0 : i32
    %c0_i32_2 = arith.constant 0 : i32
    return %arg0, %c0_i32, %2, %c0_i32_1 : i32, i32, i32, i32
  }
  func.func @transform_3(%arg0: i32, %arg1: i32) -> (i32, i32) {
    %c0_i32 = arith.constant 0 : i32
    %c0_i32_0 = arith.constant 0 : i32
    %c0_i32_1 = arith.constant 0 : i32
    return %c0_i32, %c0_i32_0 : i32, i32
  }
  func.func @transform_4(%arg0: i32, %arg1: i32) -> (i32, i32) {
    %c0_i32 = arith.constant 0 : i32
    %c0_i32_0 = arith.constant 0 : i32
    %c0_i32_1 = arith.constant 0 : i32
    return %c0_i32, %c0_i32_0 : i32, i32
  }
  func.func @transform_5(%arg0: i32, %arg1: i32) -> (i32, i32) {
    %c0_i32 = arith.constant 0 : i32
    %c0_i32_0 = arith.constant 0 : i32
    %c0_i32_1 = arith.constant 0 : i32
    return %c0_i32, %c0_i32_0 : i32, i32
  }
  func.func @transform_6(%arg0: i32, %arg1: i32) -> (i32, i32) {
    %c0_i32 = arith.constant 0 : i32
    %c0_i32_0 = arith.constant 0 : i32
    %c0_i32_1 = arith.constant 0 : i32
    return %c0_i32, %c0_i32_0 : i32, i32
  }
  func.func @transform_7(%arg0: i32, %arg1: i32) -> (i32, i32, i32) {
    %c0_i32 = arith.constant 0 : i32
    %c0_i32_0 = arith.constant 0 : i32
    return %arg0, %c0_i32, %arg1 : i32, i32, i32
  }
}

</mosaic_0001>

<llo_original>
// kernel: ccm_pallas.1
$region0: #{ccm_pallas.1}
  #allocation0 [shape = 'u32[]', space=smem, size = 0x4, offset = 0x4, fixed_abs, tag = 'smem constant byte address 0x4 - core index']
  #allocation1 [shape = 'u32[144,128]{1,0:T(1,128)}', space=vmem, size = 0x12000, scoped, tag = 'internal scratch']
  #allocation2 [shape = 'f32[36,256]{1,0:T(8,128)}', space=vmem, size = 0xa000, scoped, tag = 'scratch operand']
  %s0 = inlined_call_operand.vmem [shape: f32[2,4,256], index: 0, kind: input, shape index: {}]
  %s1 = inlined_call_operand.vmem [shape: f32[2,4,16,16], index: 1, kind: input, shape index: {}, may-alias: {1,2}]
  %s2 = inlined_call_operand.vmem [shape: f32[2,4,16,16], index: 2, kind: input, shape index: {}, may-alias: {1,2}]
  %s3 = inlined_call_operand.vmem [shape: f32[8,36], index: 3, kind: input, shape index: {}]
  %s4 = inlined_call_operand.vmem [shape: f32[8,1], index: 4, kind: input, shape index: {}]
  %s5 = inlined_call_operand.vmem [shape: f32[4,8], index: 5, kind: input, shape index: {}]
  %s6 = inlined_call_operand.vmem [shape: f32[4,1], index: 6, kind: input, shape index: {}]
  %s7 = inlined_call_operand.vmem [shape: f32[2,4,256], index: 7, kind: output, shape index: {}]
  %s8 = sld [smem:[#allocation0]]
  $region137: #{ccm_pallas.1} parent=0
    _
  %s10 = ssub.s32 1, %s8
  %s11 = scalar_select 0, %s10, %s8
  $region1: #{ccm_pallas.1} parent=0
    #allocation3 [shape = 'u8[32768]{0}', space=vmem, size = 0x8000, scoped, tag = 'input window, operand 1']
    #allocation4 [shape = 'u8[32768]{0}', space=vmem, size = 0x8000, scoped, tag = 'input window, operand 2']
    loop: start=0, step=1, limit=4
    $region2: #{ccm_pallas.1} parent=1 // loop_pre_header
      _
    $region3: #{ccm_pallas.1} parent=1 // loop_header
      %s13 = sphi 0, %s17
      %p14 = scmp.ge.s32.totalorder %s13, 4
      %s20 = sphi 0, %s32
      %s21 = sphi 0, %s28
      %s22 = sphi 0, %s20
      %s23 = sphi 0, %s21
      %s24 = sphi 0, %s22
      %s25 = sphi 0, %s23
      %s37 = sphi 0, %s39
      %s40 = sphi 0, %s37
      %s41 = sphi 0, %s40
      %s57 = sphi 0, %s41
      %s73 = sphi 0, %s75
      %s76 = sphi 0, %s73
      %s77 = sphi 0, %s76
      %s93 = sphi 0, %s77
      %s109 = sphi 0, %s111
      %s112 = sphi 0, %s109
      %s113 = sphi 0, %s112
      %s129 = sphi 0, %s113
      %s133 = sphi 0, %s133
      %s135 = sphi 0, %s133
      %s136 = sphi 0, %s135
      %s150 = sphi 0, %s136
      %s154 = sphi 0, %s154
      %s156 = sphi 0, %s154
      %s157 = sphi 0, %s156
      %s171 = sphi 0, %s157
      %s175 = sphi 0, %s175
      %s177 = sphi 0, %s175
      %s178 = sphi 0, %s177
      %s192 = sphi 0, %s178
      %s196 = sphi 0, %s196
      %s198 = sphi 0, %s196
      %s199 = sphi 0, %s198
      %s213 = sphi 0, %s199
      %s221 = sphi 0, %s223
      %s224 = sphi 0, %s221
      %s225 = sphi 0, %s224
      %s241 = sphi 0, %s225
    $region4: #{ccm_pallas.1} parent=1 // loop_header_branch
      %16 = sbr.rel (%p14) target = $region8
    $region5: #{ccm_pallas.1} parent=1 // loop_body
      %s18 = ssub.s32 %s13, 1
      %s19 = ssub.s32 %s13, 2
      %s26 = sadd.s32 1, %s21
      %p27 = scmp.ge.s32.totalorder %s26, 1
      %s28 = scalar_select %p27, 0, %s26
      %s29 = sadd.s32 1, %s20
      %s30 = scalar_select %p27, %s29, %s20
      %p31 = scmp.ge.s32.totalorder %s30, 2
      %s32 = scalar_select %p31, 0, %s30
      %s33 = ssub.s32 %s20, %s32
      %s34 = ssub.s32 %s21, %s28
      %s35 = sor.u32 %s33, %s34
      %p36 = scmp.eq.s32.totalorder %s35, 0
      %s38 = sadd.s32 %s37, 1
      %s39 = scalar_select %p36, %s37, %s38
      %p42 = pneg %p36
      %p43 = scmp.eq.s32.totalorder %s13, 1
      %p44 = por %p42, %p43
      %p45 = scmp.ne.s32.totalorder %s37, %s40
      %p46 = scmp.eq.s32.totalorder %s13, 0
      %p47 = por %p45, %p46
      %p48 = scmp.ne.s32.totalorder %s37, %s40
      %p49 = scmp.eq.s32.totalorder %s18, 1
      %p50 = por %p48, %p49
      %p51 = scmp.ne.s32.totalorder %s40, %s41
      %p52 = scmp.eq.s32.totalorder %s18, 0
      %p53 = por %p51, %p52
      %p54 = scmp.ne.s32.totalorder %s40, %s41
      %p55 = scmp.eq.s32.totalorder %s19, 1
      %p56 = por %p54, %p55
      %p58 = scmp.ne.s32.totalorder %s41, %s57
      %p59 = scmp.eq.s32.totalorder %s19, 0
      %p60 = por %p58, %p59
      %s61 = smul.u32 %s21, 2
      %s62 = ssub.s32 %s61, 1
      %p63 = scmp.gt.s32.totalorder %s62, 0
      %s64 = scalar_select %p63, %s62, 0
      %s65 = smul.u32 %s28, 2
      %s66 = ssub.s32 %s65, 1
      %p67 = scmp.gt.s32.totalorder %s66, 0
      %s68 = scalar_select %p67, %s66, 0
      %s69 = ssub.s32 %s20, %s32
      %s70 = ssub.s32 %s64, %s68
      %s71 = sor.u32 %s69, %s70
      %p72 = scmp.eq.s32.totalorder %s71, 0
      %s74 = sadd.s32 %s73, 1
      %s75 = scalar_select %p72, %s73, %s74
      %p78 = pneg %p72
      %p79 = scmp.eq.s32.totalorder %s13, 1
      %p80 = por %p78, %p79
      %p81 = scmp.ne.s32.totalorder %s73, %s76
      %p82 = scmp.eq.s32.totalorder %s13, 0
      %p83 = por %p81, %p82
      %p84 = scmp.ne.s32.totalorder %s73, %s76
      %p85 = scmp.eq.s32.totalorder %s18, 1
      %p86 = por %p84, %p85
      %p87 = scmp.ne.s32.totalorder %s76, %s77
      %p88 = scmp.eq.s32.totalorder %s18, 0
      %p89 = por %p87, %p88
      %p90 = scmp.ne.s32.totalorder %s76, %s77
      %p91 = scmp.eq.s32.totalorder %s19, 1
      %p92 = por %p90, %p91
      %p94 = scmp.ne.s32.totalorder %s77, %s93
      %p95 = scmp.eq.s32.totalorder %s19, 0
      %p96 = por %p94, %p95
      %s97 = sadd.s32 %s21, 1
      %s98 = smul.u32 %s97, 2
      %p99 = scmp.lt.s32.totalorder %s98, 1
      %s100 = scalar_select %p99, %s98, 1
      %s101 = sadd.s32 %s28, 1
      %s102 = smul.u32 %s101, 2
      %p103 = scmp.lt.s32.totalorder %s102, 1
      %s104 = scalar_select %p103, %s102, 1
      %s105 = ssub.s32 %s20, %s32
      %s106 = ssub.s32 %s100, %s104
      %s107 = sor.u32 %s105, %s106
      %p108 = scmp.eq.s32.totalorder %s107, 0
      %s110 = sadd.s32 %s109, 1
      %s111 = scalar_select %p108, %s109, %s110
      %p114 = pneg %p108
      %p115 = scmp.eq.s32.totalorder %s13, 1
      %p116 = por %p114, %p115
      %p117 = scmp.ne.s32.totalorder %s109, %s112
      %p118 = scmp.eq.s32.totalorder %s13, 0
      %p119 = por %p117, %p118
      %p120 = scmp.ne.s32.totalorder %s109, %s112
      %p121 = scmp.eq.s32.totalorder %s18, 1
      %p122 = por %p120, %p121
      %p123 = scmp.ne.s32.totalorder %s112, %s113
      %p124 = scmp.eq.s32.totalorder %s18, 0
      %p125 = por %p123, %p124
      %p126 = scmp.ne.s32.totalorder %s112, %s113
      %p127 = scmp.eq.s32.totalorder %s19, 1
      %p128 = por %p126, %p127
      %p130 = scmp.ne.s32.totalorder %s113, %s129
      %p131 = scmp.eq.s32.totalorder %s19, 0
      %p132 = por %p130, %p131
      %s134 = sadd.s32 %s133, 1
      %p137 = scmp.eq.s32.totalorder %s13, 1
      %p138 = scmp.ne.s32.totalorder %s133, %s135
      %p139 = scmp.eq.s32.totalorder %s13, 0
      %p140 = por %p138, %p139
      %p141 = scmp.ne.s32.totalorder %s133, %s135
      %p142 = scmp.eq.s32.totalorder %s18, 1
      %p143 = por %p141, %p142
      %p144 = scmp.ne.s32.totalorder %s135, %s136
      %p145 = scmp.eq.s32.totalorder %s18, 0
      %p146 = por %p144, %p145
      %p147 = scmp.ne.s32.totalorder %s135, %s136
      %p148 = scmp.eq.s32.totalorder %s19, 1
      %p149 = por %p147, %p148
      %p151 = scmp.ne.s32.totalorder %s136, %s150
      %p152 = scmp.eq.s32.totalorder %s19, 0
      %p153 = por %p151, %p152
      %s155 = sadd.s32 %s154, 1
      %p158 = scmp.eq.s32.totalorder %s13, 1
      %p159 = scmp.ne.s32.totalorder %s154, %s156
      %p160 = scmp.eq.s32.totalorder %s13, 0
      %p161 = por %p159, %p160
      %p162 = scmp.ne.s32.totalorder %s154, %s156
      %p163 = scmp.eq.s32.totalorder %s18, 1
      %p164 = por %p162, %p163
      %p165 = scmp.ne.s32.totalorder %s156, %s157
      %p166 = scmp.eq.s32.totalorder %s18, 0
      %p167 = por %p165, %p166
      %p168 = scmp.ne.s32.totalorder %s156, %s157
      %p169 = scmp.eq.s32.totalorder %s19, 1
      %p170 = por %p168, %p169
      %p172 = scmp.ne.s32.totalorder %s157, %s171
      %p173 = scmp.eq.s32.totalorder %s19, 0
      %p174 = por %p172, %p173
      %s176 = sadd.s32 %s175, 1
      %p179 = scmp.eq.s32.totalorder %s13, 1
      %p180 = scmp.ne.s32.totalorder %s175, %s177
      %p181 = scmp.eq.s32.totalorder %s13, 0
      %p182 = por %p180, %p181
      %p183 = scmp.ne.s32.totalorder %s175, %s177
      %p184 = scmp.eq.s32.totalorder %s18, 1
      %p185 = por %p183, %p184
      %p186 = scmp.ne.s32.totalorder %s177, %s178
      %p187 = scmp.eq.s32.totalorder %s18, 0
      %p188 = por %p186, %p187
      %p189 = scmp.ne.s32.totalorder %s177, %s178
      %p190 = scmp.eq.s32.totalorder %s19, 1
      %p191 = por %p189, %p190
      %p193 = scmp.ne.s32.totalorder %s178, %s192
      %p194 = scmp.eq.s32.totalorder %s19, 0
      %p195 = por %p193, %p194
      %s197 = sadd.s32 %s196, 1
      %p200 = scmp.eq.s32.totalorder %s13, 1
      %p201 = scmp.ne.s32.totalorder %s196, %s198
      %p202 = scmp.eq.s32.totalorder %s13, 0
      %p203 = por %p201, %p202
      %p204 = scmp.ne.s32.totalorder %s196, %s198
      %p205 = scmp.eq.s32.totalorder %s18, 1
      %p206 = por %p204, %p205
      %p207 = scmp.ne.s32.totalorder %s198, %s199
      %p208 = scmp.eq.s32.totalorder %s18, 0
      %p209 = por %p207, %p208
      %p210 = scmp.ne.s32.totalorder %s198, %s199
      %p211 = scmp.eq.s32.totalorder %s19, 1
      %p212 = por %p210, %p211
      %p214 = scmp.ne.s32.totalorder %s199, %s213
      %p215 = scmp.eq.s32.totalorder %s19, 0
      %p216 = por %p214, %p215
      %s217 = ssub.s32 %s20, %s32
      %s218 = ssub.s32 %s21, %s28
      %s219 = sor.u32 %s217, %s218
      %p220 = scmp.eq.s32.totalorder %s219, 0
      %s222 = sadd.s32 %s221, 1
      %s223 = scalar_select %p220, %s221, %s222
      %p226 = pneg %p220
      %p227 = scmp.eq.s32.totalorder %s13, 1
      %p228 = por %p226, %p227
      %p229 = scmp.ne.s32.totalorder %s221, %s224
      %p230 = scmp.eq.s32.totalorder %s13, 0
      %p231 = por %p229, %p230
      %p232 = scmp.ne.s32.totalorder %s221, %s224
      %p233 = scmp.eq.s32.totalorder %s18, 1
      %p234 = por %p232, %p233
      %p235 = scmp.ne.s32.totalorder %s224, %s225
      %p236 = scmp.eq.s32.totalorder %s18, 0
      %p237 = por %p235, %p236
      %p238 = scmp.ne.s32.totalorder %s224, %s225
      %p239 = scmp.eq.s32.totalorder %s19, 1
      %p240 = por %p238, %p239
      %p242 = scmp.ne.s32.totalorder %s225, %s241
      %p243 = scmp.eq.s32.totalorder %s19, 0
      %p244 = por %p242, %p243
      %p245 = scmp.le.s32.totalorder 1, %s13
      %p246 = scmp.lt.s32.totalorder %s13, 3
      %p247 = pnand %p245, %p246
      %p248 = pneg %p247
      // Predicated region
      $region9: #{ccm_pallas.1} parent=5 // pred_check
        _
      $region10: #{ccm_pallas.1} parent=5 // pred_check_branch
        %250 = sbr.rel (%p247) target = $region12
      $region11: #{ccm_pallas.1} parent=5 // pred_region
        %s251 = ssub.s32 %s13, 1
        // Predicated region
        $region13: #{ccm_pallas.1} parent=11 // pred_check
          %p252 = pneg %p146
        $region14: #{ccm_pallas.1} parent=11 // pred_check_branch
          %254 = sbr.rel (%p252) target = $region16
        $region15: #{ccm_pallas.1} parent=11 // pred_region
          _
        $region16: #{ccm_pallas.1} parent=11 // pred_fallthru
          _
        // Predicated region
        $region17: #{ccm_pallas.1} parent=11 // pred_check
          %p255 = pneg %p167
        $region18: #{ccm_pallas.1} parent=11 // pred_check_branch
          %257 = sbr.rel (%p255) target = $region20
        $region19: #{ccm_pallas.1} parent=11 // pred_region
          _
        $region20: #{ccm_pallas.1} parent=11 // pred_fallthru
          _
        // Predicated region
        $region21: #{ccm_pallas.1} parent=11 // pred_check
          %p258 = pneg %p188
        $region22: #{ccm_pallas.1} parent=11 // pred_check_branch
          %260 = sbr.rel (%p258) target = $region24
        $region23: #{ccm_pallas.1} parent=11 // pred_region
          _
        $region24: #{ccm_pallas.1} parent=11 // pred_fallthru
          _
        // Predicated region
        $region25: #{ccm_pallas.1} parent=11 // pred_check
          %p261 = pneg %p209
        $region26: #{ccm_pallas.1} parent=11 // pred_check_branch
          %263 = sbr.rel (%p261) target = $region28
        $region27: #{ccm_pallas.1} parent=11 // pred_region
          _
        $region28: #{ccm_pallas.1} parent=11 // pred_fallthru
          _
      $region12: #{ccm_pallas.1} parent=5 // pred_fallthru
        _
      %p264 = scmp.lt.s32.totalorder %s13, 2
      // Predicated region
      $region29: #{ccm_pallas.1} parent=5 // pred_check
        %p265 = pneg %p264
      $region30: #{ccm_pallas.1} parent=5 // pred_check_branch
        %267 = sbr.rel (%p265) target = $region32
      $region31: #{ccm_pallas.1} parent=5 // pred_region
        // Predicated region
        $region33: #{ccm_pallas.1} parent=31 // pred_check
          %p268 = pneg %p47
        $region34: #{ccm_pallas.1} parent=31 // pred_check_branch
          %270 = sbr.rel (%p268) target = $region36
        $region35: #{ccm_pallas.1} parent=31 // pred_region
          %s271 = smul.u32 2, %s21
          %p272 = scmp.lt.s32.totalorder %s20, 1
          %s273 = scalar_select %p272, %s20, 1
          %p274 = scmp.lt.s32.totalorder %s271, 1
          %s275 = scalar_select %p274, %s271, 1
          %s276 = smul.addr %s273, 2
          %s277 = sadd.s32 %s275, %s276
          %s278 = smul.addr %s277, 4
          %s279 = scalar_lea.vmem %s0, %s278
          %s280 = smul.u32 2, %s21
        $region36: #{ccm_pallas.1} parent=31 // pred_fallthru
          _
        // Predicated region
        $region37: #{ccm_pallas.1} parent=31 // pred_check
          %p281 = pneg %p83
        $region38: #{ccm_pallas.1} parent=31 // pred_check_branch
          %283 = sbr.rel (%p281) target = $region40
        $region39: #{ccm_pallas.1} parent=31 // pred_region
          %s284 = sand.u32 %s73, 1
          %s285 = sand.u32 %s73, 1
          %s286 = smul.addr %s285, 32
          %s287 = scalar_lea.vmem [#allocation3], %s286
          %s288 = smul.u32 %s21, 2
          %s289 = ssub.s32 %s288, 1
          %p290 = scmp.gt.s32.totalorder %s289, 0
          %s291 = scalar_select %p290, %s289, 0
          %s292 = smul.addr %s20, 8
          %s293 = sadd.s32 %s291, %s292
          %s294 = smul.addr %s293, 8
          %s295 = scalar_lea.vmem %s1, %s294
          // Predicated region
          $region41: #{ccm_pallas.1} parent=39 // pred_check
            _
          $region42: #{ccm_pallas.1} parent=39 // pred_check_branch
            %297 = sbr.rel (0) target = $region44
          $region43: #{ccm_pallas.1} parent=39 // pred_region
            // Predicated region
            $region45: #{ccm_pallas.1} parent=43 // pred_check
              _
            $region46: #{ccm_pallas.1} parent=43 // pred_check_branch
              %299 = sbr.rel (0) target = $region48
            $region47: #{ccm_pallas.1} parent=43 // pred_region
              // Predicated region
              $region60: #{ccm_pallas.1} parent=47 // pred_check
                _
              $region61: #{ccm_pallas.1} parent=47 // pred_check_branch
                %320 = sbr.rel (0) target = $region63
              $region62: #{ccm_pallas.1} parent=47 // pred_region
                loop: start=0, step=1, limit=1
                $region64: #{ccm_pallas.1} parent=62 // loop_pre_header
                  _
                $region65: #{ccm_pallas.1} parent=62 // loop_header
                  %s322 = sphi 0, %s326
                  %p323 = scmp.ge.s32.totalorder %s322, 1
                  %s327 = sphi %s295, %s295
                  %s328 = sphi %s287, %s287
                $region66: #{ccm_pallas.1} parent=62 // loop_header_branch
                  %325 = sbr.rel (%p323) target = $region70
                $region67: #{ccm_pallas.1} parent=62 // loop_body
                  %v329 = vld [vmem:[%s327] sm:$0xff]
                  %330 = vst [vmem:[%s328] sm:$0xff] %v329
                  %v331 = vld [vmem:[%s327 + $0x10] sm:$0xff]
                  %332 = vst [vmem:[%s328 + $0x8] sm:$0xff] %v331
                  %v333 = vld [vmem:[%s327 + $0x20] sm:$0xff]
                  %334 = vst [vmem:[%s328 + $0x10] sm:$0xff] %v333
                  %v335 = vld [vmem:[%s327 + $0x30] sm:$0xff]
                  %336 = vst [vmem:[%s328 + $0x18] sm:$0xff] %v335
                $region68: #{ccm_pallas.1} parent=62 // loop_footer
                  %s326 = sadd.s32 1, %s322
                $region69: #{ccm_pallas.1} parent=62 // loop_footer_branch
                  %321 = sbr.rel target = $region65
                $region70: #{ccm_pallas.1} parent=62 // loop_exit
                  _
              $region63: #{ccm_pallas.1} parent=47 // pred_fallthru
                _
              // Predicated region
              $region71: #{ccm_pallas.1} parent=47 // pred_check
                _
              $region72: #{ccm_pallas.1} parent=47 // pred_check_branch
                %338 = sbr.rel target = $region74
              $region73: #{ccm_pallas.1} parent=47 // pred_region
                _
              $region74: #{ccm_pallas.1} parent=47 // pred_fallthru
                _
            $region48: #{ccm_pallas.1} parent=43 // pred_fallthru
              _
            // Predicated region
            $region49: #{ccm_pallas.1} parent=43 // pred_check
              _
            $region50: #{ccm_pallas.1} parent=43 // pred_check_branch
              %301 = sbr.rel target = $region52
            $region51: #{ccm_pallas.1} parent=43 // pred_region
              loop: start=0, step=1, limit=1
              $region53: #{ccm_pallas.1} parent=51 // loop_pre_header
                _
              $region54: #{ccm_pallas.1} parent=51 // loop_header
                %s304 = sphi 0, %s308
                %p305 = scmp.ge.s32.totalorder %s304, 1
                %s309 = sphi %s295, %s295
                %s310 = sphi %s287, %s287
              $region55: #{ccm_pallas.1} parent=51 // loop_header_branch
                %307 = sbr.rel (%p305) target = $region59
              $region56: #{ccm_pallas.1} parent=51 // loop_body
                %v311 = vld [vmem:[%s309] sm:$0xff]
                %312 = vst [vmem:[%s310] sm:$0xff] %v311
                %v313 = vld [vmem:[%s309 + $0x10] sm:$0xff]
                %314 = vst [vmem:[%s310 + $0x8] sm:$0xff] %v313
                %v315 = vld [vmem:[%s309 + $0x20] sm:$0xff]
                %316 = vst [vmem:[%s310 + $0x10] sm:$0xff] %v315
                %v317 = vld [vmem:[%s309 + $0x30] sm:$0xff]
                %318 = vst [vmem:[%s310 + $0x18] sm:$0xff] %v317
              $region57: #{ccm_pallas.1} parent=51 // loop_footer
                %s308 = sadd.s32 1, %s304
              $region58: #{ccm_pallas.1} parent=51 // loop_footer_branch
                %303 = sbr.rel target = $region54
              $region59: #{ccm_pallas.1} parent=51 // loop_exit
                _
            $region52: #{ccm_pallas.1} parent=43 // pred_fallthru
              _
          $region44: #{ccm_pallas.1} parent=39 // pred_fallthru
            _
          %339 = vnop
        $region40: #{ccm_pallas.1} parent=31 // pred_fallthru
          _
        // Predicated region
        $region75: #{ccm_pallas.1} parent=31 // pred_check
          %p340 = pneg %p119
        $region76: #{ccm_pallas.1} parent=31 // pred_check_branch
          %342 = sbr.rel (%p340) target = $region78
        $region77: #{ccm_pallas.1} parent=31 // pred_region
          %s343 = sand.u32 %s109, 1
          %s344 = sand.u32 %s109, 1
          %s345 = smul.addr %s344, 32
          %s346 = scalar_lea.vmem [#allocation4], %s345
          %s347 = sadd.s32 %s21, 1
          %s348 = smul.u32 %s347, 2
          %p349 = scmp.lt.s32.totalorder %s348, 1
          %s350 = scalar_select %p349, %s348, 1
          %s351 = smul.addr %s20, 8
          %s352 = sadd.s32 %s350, %s351
          %s353 = smul.addr %s352, 8
          %s354 = scalar_lea.vmem %s2, %s353
          // Predicated region
          $region79: #{ccm_pallas.1} parent=77 // pred_check
            _
          $region80: #{ccm_pallas.1} parent=77 // pred_check_branch
            %356 = sbr.rel (0) target = $region82
          $region81: #{ccm_pallas.1} parent=77 // pred_region
            // Predicated region
            $region83: #{ccm_pallas.1} parent=81 // pred_check
              _
            $region84: #{ccm_pallas.1} parent=81 // pred_check_branch
              %358 = sbr.rel (0) target = $region86
            $region85: #{ccm_pallas.1} parent=81 // pred_region
              // Predicated region
              $region98: #{ccm_pallas.1} parent=85 // pred_check
                _
              $region99: #{ccm_pallas.1} parent=85 // pred_check_branch
                %379 = sbr.rel (0) target = $region101
              $region100: #{ccm_pallas.1} parent=85 // pred_region
                loop: start=0, step=1, limit=1
                $region102: #{ccm_pallas.1} parent=100 // loop_pre_header
                  _
                $region103: #{ccm_pallas.1} parent=100 // loop_header
                  %s381 = sphi 0, %s385
                  %p382 = scmp.ge.s32.totalorder %s381, 1
                  %s386 = sphi %s354, %s354
                  %s387 = sphi %s346, %s346
                $region104: #{ccm_pallas.1} parent=100 // loop_header_branch
                  %384 = sbr.rel (%p382) target = $region108
                $region105: #{ccm_pallas.1} parent=100 // loop_body
                  %v388 = vld [vmem:[%s386] sm:$0xff]
                  %389 = vst [vmem:[%s387] sm:$0xff] %v388
                  %v390 = vld [vmem:[%s386 + $0x10] sm:$0xff]
                  %391 = vst [vmem:[%s387 + $0x8] sm:$0xff] %v390
                  %v392 = vld [vmem:[%s386 + $0x20] sm:$0xff]
                  %393 = vst [vmem:[%s387 + $0x10] sm:$0xff] %v392
                  %v394 = vld [vmem:[%s386 + $0x30] sm:$0xff]
                  %395 = vst [vmem:[%s387 + $0x18] sm:$0xff] %v394
                $region106: #{ccm_pallas.1} parent=100 // loop_footer
                  %s385 = sadd.s32 1, %s381
                $region107: #{ccm_pallas.1} parent=100 // loop_footer_branch
                  %380 = sbr.rel target = $region103
                $region108: #{ccm_pallas.1} parent=100 // loop_exit
                  _
              $region101: #{ccm_pallas.1} parent=85 // pred_fallthru
                _
              // Predicated region
              $region109: #{ccm_pallas.1} parent=85 // pred_check
                _
              $region110: #{ccm_pallas.1} parent=85 // pred_check_branch
                %397 = sbr.rel target = $region112
              $region111: #{ccm_pallas.1} parent=85 // pred_region
                _
              $region112: #{ccm_pallas.1} parent=85 // pred_fallthru
                _
            $region86: #{ccm_pallas.1} parent=81 // pred_fallthru
              _
            // Predicated region
            $region87: #{ccm_pallas.1} parent=81 // pred_check
              _
            $region88: #{ccm_pallas.1} parent=81 // pred_check_branch
              %360 = sbr.rel target = $region90
            $region89: #{ccm_pallas.1} parent=81 // pred_region
              loop: start=0, step=1, limit=1
              $region91: #{ccm_pallas.1} parent=89 // loop_pre_header
                _
              $region92: #{ccm_pallas.1} parent=89 // loop_header
                %s363 = sphi 0, %s367
                %p364 = scmp.ge.s32.totalorder %s363, 1
                %s368 = sphi %s354, %s354
                %s369 = sphi %s346, %s346
              $region93: #{ccm_pallas.1} parent=89 // loop_header_branch
                %366 = sbr.rel (%p364) target = $region97
              $region94: #{ccm_pallas.1} parent=89 // loop_body
                %v370 = vld [vmem:[%s368] sm:$0xff]
                %371 = vst [vmem:[%s369] sm:$0xff] %v370
                %v372 = vld [vmem:[%s368 + $0x10] sm:$0xff]
                %373 = vst [vmem:[%s369 + $0x8] sm:$0xff] %v372
                %v374 = vld [vmem:[%s368 + $0x20] sm:$0xff]
                %375 = vst [vmem:[%s369 + $0x10] sm:$0xff] %v374
                %v376 = vld [vmem:[%s368 + $0x30] sm:$0xff]
                %377 = vst [vmem:[%s369 + $0x18] sm:$0xff] %v376
              $region95: #{ccm_pallas.1} parent=89 // loop_footer
                %s367 = sadd.s32 1, %s363
              $region96: #{ccm_pallas.1} parent=89 // loop_footer_branch
                %362 = sbr.rel target = $region92
              $region97: #{ccm_pallas.1} parent=89 // loop_exit
                _
            $region90: #{ccm_pallas.1} parent=81 // pred_fallthru
              _
          $region82: #{ccm_pallas.1} parent=77 // pred_fallthru
            _
          %398 = vnop
        $region78: #{ccm_pallas.1} parent=31 // pred_fallthru
          _
      $region32: #{ccm_pallas.1} parent=5 // pred_fallthru
        _
      %p399 = scmp.le.s32.totalorder 1, %s13
      %p400 = scmp.lt.s32.totalorder %s13, 3
      %p401 = pnand %p399, %p400
      %p402 = pneg %p401
      // Predicated region
      $region113: #{ccm_pallas.1} parent=5 // pred_check
        _
      $region114: #{ccm_pallas.1} parent=5 // pred_check_branch
        %404 = sbr.rel (%p401) target = $region116
      $region115: #{ccm_pallas.1} parent=5 // pred_region
        %s405 = ssub.s32 %s13, 1
        %s406 = sand.u32 %s76, 1
        %s407 = sand.u32 %s76, 1
        %s408 = smul.addr %s407, 32
        %s409 = scalar_lea.vmem [#allocation3], %s408
        // Predicated region
        $region117: #{ccm_pallas.1} parent=115 // pred_check
          %p410 = pneg %p89
        $region118: #{ccm_pallas.1} parent=115 // pred_check_branch
          %412 = sbr.rel (%p410) target = $region120
        $region119: #{ccm_pallas.1} parent=115 // pred_region
          _
        $region120: #{ccm_pallas.1} parent=115 // pred_fallthru
          _
        %s413 = sand.u32 %s112, 1
        %s414 = sand.u32 %s112, 1
        %s415 = smul.addr %s414, 32
        %s416 = scalar_lea.vmem [#allocation4], %s415
        // Predicated region
        $region121: #{ccm_pallas.1} parent=115 // pred_check
          %p417 = pneg %p125
        $region122: #{ccm_pallas.1} parent=115 // pred_check_branch
          %419 = sbr.rel (%p417) target = $region124
        $region123: #{ccm_pallas.1} parent=115 // pred_region
          _
        $region124: #{ccm_pallas.1} parent=115 // pred_fallthru
          _
        %s420 = smul.u32 2, %s23
        %p421 = scmp.lt.s32.totalorder %s22, 1
        %s422 = scalar_select %p421, %s22, 1
        %p423 = scmp.lt.s32.totalorder %s420, 1
        %s424 = scalar_select %p423, %s420, 1
        %s425 = smul.addr %s422, 2
        %s426 = sadd.s32 %s424, %s425
        %s427 = smul.addr %s426, 4
        %s428 = scalar_lea.vmem %s0, %s427
        %p429 = pneg %p53
        %p430 = pneg %p50
        %s431 = sand.u32 %s76, 1
        %s432 = sand.u32 %s76, 1
        %s433 = smul.addr %s432, 32
        %s434 = scalar_lea.vmem [#allocation3], %s433
        %p435 = pneg %p89
        %p436 = pneg %p86
        %s437 = sand.u32 %s112, 1
        %s438 = sand.u32 %s112, 1
        %s439 = smul.addr %s438, 32
        %s440 = scalar_lea.vmem [#allocation4], %s439
        %p441 = pneg %p125
        %p442 = pneg %p122
        %p443 = pneg %p146
        %p444 = pneg %p143
        %p445 = pneg %p167
        %p446 = pneg %p164
        %p447 = pneg %p188
        %p448 = pneg %p185
        %p449 = pneg %p209
        %p450 = pneg %p206
        %p451 = pneg %p237
        %p452 = pneg %p234
        %s453 = smul.u32 2, %s23
        %p454 = scmp.lt.s32.totalorder %s22, 1
        %s455 = scalar_select %p454, %s22, 1
        %p456 = scmp.lt.s32.totalorder %s453, 1
        %s457 = scalar_select %p456, %s453, 1
        %s458 = smul.addr %s455, 2
        %s459 = sadd.s32 %s457, %s458
        %s460 = smul.addr %s459, 4
        %s461 = scalar_lea.vmem %s7, %s460
        %s462 = smul.u32 2, %s23
        %p463 = scmp.lt.s32.totalorder %s22, 1
        %s464 = scalar_select %p463, %s22, 1
        %p465 = scmp.lt.s32.totalorder %s462, 1
        %s466 = scalar_select %p465, %s462, 1
        %s467 = smul.addr %s464, 2
        %s468 = sadd.s32 %s466, %s467
        %s469 = smul.addr %s468, 4
        %s470 = scalar_lea.vmem %s0, %s469
        %s471 = smul.u32 2, %s23
        %s472 = smul.u32 %s23, 2
        %s473 = ssub.s32 %s472, 1
        %p474 = scmp.gt.s32.totalorder %s473, 0
        %s475 = scalar_select %p474, %s473, 0
        %s476 = sadd.s32 %s23, 1
        %s477 = smul.u32 %s476, 2
        %p478 = scmp.lt.s32.totalorder %s477, 1
        %s479 = scalar_select %p478, %s477, 1
        %s480 = smul.u32 2, %s23
        %p481 = scmp.lt.s32.totalorder %s22, 1
        %s482 = scalar_select %p481, %s22, 1
        %p483 = scmp.lt.s32.totalorder %s480, 1
        %s484 = scalar_select %p483, %s480, 1
        %s485 = smul.addr %s482, 2
        %s486 = sadd.s32 %s484, %s485
        %s487 = smul.addr %s486, 4
        %s488 = scalar_lea.vmem %s7, %s487
        %s489 = smul.u32 2, %s23
        %v490 = vld [vmem:[%s409 + $0x7] sm:$0x1]
        %v491 = vld [vmem:[%s409 + $0xf] sm:$0x1]
        %v492 = vld [vmem:[%s409 + $0x17] sm:$0x1]
        %v493 = vld [vmem:[%s409 + $0x1f] sm:$0x1]
        %p494 = scmp.gt.s32.totalorder %s23, 0
        %s495 = scalar_select %p494, 1, 0
        %s496 = scvt.s32.f32 %s495
        %v497 = vstv %s496
        %v498 = vmul.f32 %v490, %v497
        %v499 = vmul.f32 %v491, %v497
        %v500 = vmul.f32 %v492, %v497
        %v501 = vmul.f32 %v493, %v497
        %v502 = vld [vmem:[%s416] sm:$0x1]
        %v503 = vld [vmem:[%s416 + $0x8] sm:$0x1]
        %v504 = vld [vmem:[%s416 + $0x10] sm:$0x1]
        %v505 = vld [vmem:[%s416 + $0x18] sm:$0x1]
        %p506 = scmp.lt.s32.totalorder %s23, 0
        %s507 = scalar_select %p506, 1, 0
        %s508 = scvt.s32.f32 %s507
        %v509 = vstv %s508
        %v510 = vmul.f32 %v502, %v509
        %v511 = vmul.f32 %v503, %v509
        %v512 = vmul.f32 %v504, %v509
        %v513 = vmul.f32 %v505, %v509
        %v514 = vld [vmem:[%s470] sm:$0xff]
        %v519 = vrot.slane %v499, 7
        %vm520 = vcmask 1041409
        %v521 = vsel %vm520, %v519, %v498
        %v522 = vrot.slane %v500, 6
        %vm523 = vcmask 1042434
        %v524 = vsel %vm523, %v522, %v521
        %v525 = vrot.slane %v501, 5
        %vm526 = vcmask 1043459
        %v527 = vsel %vm526, %v525, %v524
        %528 = vrot.lane.b32.xlu0 %v527, 1
        %v529 = vpop.permute.xlu0 %528
        %v532 = vcombine.high %v514, %v514
        %533 = vrot.lane.b32.xlu0 %v514, 17
        %v534 = vpop.permute.xlu0 %533
        %535 = vrot.lane.b32.xlu0 %v532, 17
        %v536 = vpop.permute.xlu0 %535
        %vm537 = vcmask 138240
        %v538 = vsel %vm537, %v534, %v536
        %v546 = vrot.slane %v511, 7
        %v547 = vsel %vm520, %v546, %v510
        %v548 = vrot.slane %v512, 6
        %v549 = vsel %vm523, %v548, %v547
        %v550 = vrot.slane %v513, 5
        %v551 = vsel %vm526, %v550, %v549
        %552 = vrot.lane.b32.xlu0 %v551, 17
        %v553 = vpop.permute.xlu0 %552
        %vm555 = vcmask 7168
        %v556 = vsel %vm555, 0.0, %v529
        %v557 = vsel %vm537, %v556, %v534
        %v558 = vsel %vm537, %v536, %v553
        %vm559 = vcmask 269312
        %v560 = vsel %vm559, %v558, 0.0
        %v561 = vlaneseq
        %v562 = vand.u32 %v561, 127
        %v563 = vadd.s32 %v562, 128
        %v564 = vcvt.s32.f32 %v562
        %v565 = vcvt.s32.f32 %v563
        %v566 = vadd.f32 %v564, 0.5
        %v567 = vadd.f32 %v565, 0.5
        %v568 = vrcp.pop 16.0
        %v569 = vmul.f32 %v566, %v568
        %v570 = vmul.f32 %v567, %v568
        %v571 = vfloor.f32 %v569
        %v572 = vfloor.f32 %v570
        %v573 = vmul.f32 %v571, 16.0
        %v574 = vmul.f32 %v572, 16.0
        %v575 = vsub.f32 %v564, %v573
        %v576 = vsub.f32 %v565, %v574
        %vm577 = vcmp.ne.f32.partialorder %v575, 0.0
        %vm578 = vcmp.ne.f32.partialorder %v576, 0.0
        %vm579 = vcmp.ne.f32.partialorder %v575, 15.0
        %vm580 = vcmp.ne.f32.partialorder %v576, 15.0
        %v581 = vsel %vm577, 1, 0
        %v582 = vsel %vm578, 1, 0
        %vm583 = vcmp.eq.s32.totalorder %v581, 1
        %vm584 = vcmp.eq.s32.totalorder %v582, 1
        %v585 = vsel %vm583, %v557, 0.0
        %v586 = vsel %vm584, %v538, 0.0
        %v589 = vrot.slane %v557, 4
        %v590 = vrot.slane %v538, 4
        %v591 = vrot.slane %v560, 4
        %592 = vrot.lane.b32.xlu0 %v589, 127
        %v593 = vpop.permute.xlu0 %592
        %594 = vrot.lane.b32.xlu0 %v590, 127
        %v595 = vpop.permute.xlu0 %594
        %596 = vrot.lane.b32.xlu0 %v591, 127
        %v597 = vpop.permute.xlu0 %596
        %vm598 = vcmask 1039360
        %v599 = vsel %vm598, %v593, %v595
        %v600 = vsel %vm598, %v595, %v597
        %vm603 = vcmask 1043456
        %v604 = vsel %vm603, %v585, %v599
        %v605 = vsel %vm603, %v586, %v600
        %606 = vst [vmem:[#allocation2] sm:$0xff] %v604
        %607 = vst [vmem:[#allocation2 + $0x8] sm:$0xff] %v605
        %v608 = vsel %vm579, 1, 0
        %v609 = vsel %vm580, 1, 0
        %vm610 = vcmp.eq.s32.totalorder %v608, 1
        %vm611 = vcmp.eq.s32.totalorder %v609, 1
        %612 = vrot.lane.b32.xlu0 %v557, 126
        %v613 = vpop.permute.xlu0 %612
        %614 = vrot.lane.b32.xlu0 %v538, 126
        %v615 = vpop.permute.xlu0 %614
        %616 = vrot.lane.b32.xlu0 %v560, 126
        %v617 = vpop.permute.xlu0 %616
        %vm618 = vcmask 1031168
        %v619 = vsel %vm618, %v613, %v615
        %v620 = vsel %vm618, %v615, %v617
        %v623 = vsel %vm610, %v619, 0.0
        %v624 = vsel %vm611, %v620, 0.0
        %625 = vrot.lane.b32.xlu0 %v557, 112
        %v626 = vpop.permute.xlu0 %625
        %627 = vrot.lane.b32.xlu0 %v538, 112
        %v628 = vpop.permute.xlu0 %627
        %629 = vrot.lane.b32.xlu0 %v560, 112
        %v630 = vpop.permute.xlu0 %629
        %vm631 = vcmask 916480
        %v632 = vsel %vm631, %v626, %v628
        %v633 = vsel %vm631, %v628, %v630
        %v636 = vsel %vm583, %v632, 0.0
        %v637 = vsel %vm584, %v633, 0.0
        %v640 = vrot.slane %v636, 4
        %v641 = vrot.slane %v637, 4
        %v644 = vsel %vm603, %v623, %v640
        %v645 = vsel %vm603, %v624, %v641
        %646 = vst [vmem:[#allocation2 + $0x10] sm:$0xff] %v644
        %647 = vst [vmem:[#allocation2 + $0x18] sm:$0xff] %v645
        %648 = vrot.lane.b32.xlu0 %v557, 110
        %v649 = vpop.permute.xlu0 %648
        %650 = vrot.lane.b32.xlu0 %v538, 110
        %v651 = vpop.permute.xlu0 %650
        %652 = vrot.lane.b32.xlu0 %v560, 110
        %v653 = vpop.permute.xlu0 %652
        %vm654 = vcmask 900096
        %v655 = vsel %vm654, %v649, %v651
        %v656 = vsel %vm654, %v651, %v653
        %v659 = vsel %vm610, %v655, 0.0
        %v660 = vsel %vm611, %v656, 0.0
        %v663 = vrot.slane %v659, 4
        %v664 = vrot.slane %v660, 4
        %665 = vrot.lane.b32.xlu0 %v663, 17
        %v666 = vpop.permute.xlu0 %665
        %667 = vrot.lane.b32.xlu0 %v664, 17
        %v668 = vpop.permute.xlu0 %667
        %v669 = vsel %vm537, %v666, %v668
        %v673 = vsel %vm603, %v557, %v666
        %v674 = vsel %vm603, %v538, %v669
        %v675 = vsel %vm603, %v560, %v668
        %679 = vrot.lane.b32.xlu0 %v673, 111
        %v680 = vpop.permute.xlu0 %679
        %681 = vrot.lane.b32.xlu0 %v674, 111
        %v682 = vpop.permute.xlu0 %681
        %683 = vrot.lane.b32.xlu0 %v675, 111
        %v684 = vpop.permute.xlu0 %683
        %vm685 = vcmask 908288
        %v686 = vsel %vm685, %v680, %v682
        %v687 = vsel %vm685, %v682, %v684
        %690 = vst [vmem:[#allocation2 + $0x20] sm:$0xff] %v686
        %691 = vst [vmem:[#allocation2 + $0x28] sm:$0xff] %v687
        %692 = vrot.lane.b32.xlu0 %v557, 96
        %v693 = vpop.permute.xlu0 %692
        %694 = vrot.lane.b32.xlu0 %v538, 96
        %v695 = vpop.permute.xlu0 %694
        %696 = vrot.lane.b32.xlu0 %v560, 96
        %v697 = vpop.permute.xlu0 %696
        %vm698 = vcmask 785408
        %v699 = vsel %vm698, %v693, %v695
        %v700 = vsel %vm698, %v695, %v697
        %v703 = vsel %vm583, %v699, 0.0
        %v704 = vsel %vm584, %v700, 0.0
        %705 = vrot.lane.b32.xlu0 %v589, 95
        %v706 = vpop.permute.xlu0 %705
        %707 = vrot.lane.b32.xlu0 %v590, 95
        %v708 = vpop.permute.xlu0 %707
        %709 = vrot.lane.b32.xlu0 %v591, 95
        %v710 = vpop.permute.xlu0 %709
        %vm711 = vcmask 777216
        %v712 = vsel %vm711, %v706, %v708
        %v713 = vsel %vm711, %v708, %v710
        %v716 = vsel %vm603, %v703, %v712
        %v717 = vsel %vm603, %v704, %v713
        %718 = vst [vmem:[#allocation2 + $0x30] sm:$0xff] %v716
        %719 = vst [vmem:[#allocation2 + $0x38] sm:$0xff] %v717
        %720 = vrot.lane.b32.xlu0 %v557, 94
        %v721 = vpop.permute.xlu0 %720
        %722 = vrot.lane.b32.xlu0 %v538, 94
        %v723 = vpop.permute.xlu0 %722
        %724 = vrot.lane.b32.xlu0 %v560, 94
        %v725 = vpop.permute.xlu0 %724
        %vm726 = vcmask 769024
        %v727 = vsel %vm726, %v721, %v723
        %v728 = vsel %vm726, %v723, %v725
        %v731 = vsel %vm610, %v727, 0.0
        %v732 = vsel %vm611, %v728, 0.0
        %733 = vst [vmem:[#allocation2 + $0x40] sm:$0xf] %v731
        %734 = vst [vmem:[#allocation2 + $0x48] sm:$0xf] %v732
        %v735 = vld [vmem:[%s3] sm:$0xff]
        %v736 = vld [vmem:[#allocation2] sm:$0xff]
        %v737 = vld [vmem:[#allocation2 + $0x8] sm:$0xff]
        %v738 = vld [vmem:[#allocation2 + $0x10] sm:$0xff]
        %v739 = vld [vmem:[#allocation2 + $0x18] sm:$0xff]
        %v740 = vld [vmem:[#allocation2 + $0x20] sm:$0xff]
        %v741 = vld [vmem:[#allocation2 + $0x28] sm:$0xff]
        %v742 = vld [vmem:[#allocation2 + $0x30] sm:$0xff]
        %v743 = vld [vmem:[#allocation2 + $0x38] sm:$0xff]
        %v744 = vld [vmem:[#allocation2 + $0x40] sm:$0xf]
        %v745 = vld [vmem:[#allocation2 + $0x48] sm:$0xf]
        %v746 = vld [vmem:[%s4] sm:$0xff]
        %748 = vset.pattern.permute.xlu0 0
        %749 = vperm.xlu0 %748, %v746
        %v750 = vpop.permute.xlu0 %749
        %vm752 = vcmask 293888
        %v754 = vsel %vm752, %v735, 0
        %v757 = vsel %vm603, %v744, 0
        %v760 = vsel %vm603, %v745, 0
        %v762 = vand.u32 %v737, 4294901760
        %763 = vmatprep.subr.mxu0 %v762
        %v764 = vand.u32 %v736, 4294901760
        %765 = vmatpush1.msra.mxu0 %v764
        %v766 = vand.u32 %v739, 4294901760
        %767 = vmatprep.subr.mxu0 %v766
        %v768 = vand.u32 %v738, 4294901760
        %769 = vmatpush1.msra.mxu0 %v768
        %v770 = vand.u32 %v741, 4294901760
        %771 = vmatprep.subr.mxu0 %v770
        %v772 = vand.u32 %v740, 4294901760
        %773 = vmatpush1.msra.mxu0 %v772
        %v774 = vand.u32 %v743, 4294901760
        %775 = vmatprep.subr.mxu0 %v774
        %v776 = vand.u32 %v742, 4294901760
        %777 = vmatpush1.msra.mxu0 %v776
        %v778 = vand.u32 %v760, 4294901760
        %779 = vmatprep.subr.mxu0 %v778
        %v780 = vand.u32 %v757, 4294901760
        %781 = vmatpush1.msra.mxu0 %v780
        %782 = vmatprep.subr.mxu0 0.0
        %783 = vmatpush1.msra.mxu0 0.0
        %784 = vmatprep.subr.mxu0 0.0
        %785 = vmatpush1.msra.mxu0 0.0
        %786 = vmatprep.subr.mxu0 0.0
        %787 = vmatpush1.msra.mxu0 0.0
        %788 = vmatprep.subr.mxu0 0.0
        %789 = vmatpush1.msra.mxu0 0.0
        %790 = vmatprep.subr.mxu0 0.0
        %791 = vmatpush1.msra.mxu0 0.0
        %792 = vmatprep.subr.mxu0 0.0
        %793 = vmatpush1.msra.mxu0 0.0
        %794 = vmatprep.subr.mxu0 0.0
        %795 = vmatpush1.msra.mxu0 0.0
        %796 = vmatprep.subr.mxu0 0.0
        %797 = vmatpush1.msra.mxu0 0.0
        %798 = vmatprep.subr.mxu0 0.0
        %799 = vmatpush1.msra.mxu0 0.0
        %800 = vmatprep.subr.mxu0 0.0
        %801 = vmatpush1.msra.mxu0 0.0
        %802 = vmatprep.subr.mxu0 0.0
        %803 = vmatpush1.msra.mxu0 0.0
        %804 = vmatprep.subr.mxu0 0.0
        %805 = vmatpush1.msra.mxu0 0.0
        %806 = vmatprep.subr.mxu0 0.0
        %807 = vmatpush1.msra.mxu0 0.0
        %808 = vmatprep.subr.mxu0 0.0
        %809 = vmatpush1.msra.mxu0 0.0
        %810 = vmatprep.subr.mxu0 0.0
        %811 = vmatpush1.msra.mxu0 0.0
        %812 = vmatprep.subr.mxu0 0.0
        %813 = vmatpush1.msra.mxu0 0.0
        %814 = vmatprep.subr.mxu0 0.0
        %815 = vmatpush1.msra.mxu0 0.0
        %816 = vmatprep.subr.mxu0 0.0
        %817 = vmatpush1.msra.mxu0 0.0
        %818 = vmatprep.subr.mxu0 0.0
        %819 = vmatpush1.msra.mxu0 0.0
        %820 = vmatprep.subr.mxu0 0.0
        %821 = vmatpush1.msra.mxu0 0.0
        %822 = vmatprep.subr.mxu0 0.0
        %823 = vmatpush1.msra.mxu0 0.0
        %824 = vmatprep.subr.mxu0 0.0
        %825 = vmatpush1.msra.mxu0 0.0
        %826 = vmatprep.subr.mxu0 0.0
        %827 = vmatpush1.msra.mxu0 0.0
        %828 = vmatprep.subr.mxu0 0.0
        %829 = vmatpush1.msra.mxu0 0.0
        %830 = vmatprep.subr.mxu0 0.0
        %831 = vmatpush1.msra.mxu0 0.0
        %832 = vmatprep.subr.mxu0 0.0
        %833 = vmatpush1.msra.mxu0 0.0
        %834 = vmatprep.subr.mxu0 0.0
        %835 = vmatpush1.msra.mxu0 0.0
        %836 = vmatprep.mubr.f32.mxu0 0.0
        %v837 = vand.u32 %v754, 4294901760
        %v838 = vsub.f32 %v754, %v837
        %v839 = vand.u32 %v838, 4294901760
        %v840 = vsub.f32 %v838, %v839
        %v841 = vand.u32 %v840, 4294901760
        %842 = vmatmul.mubr.f32.gmra.mrb[0].mxu0 %v841
        %v843 = vpop.f32.mrb[0].mxu0
        %v844 = vadd.f32 %v750, %v843
        %v845 = vpop.f32.mrb[0].mxu0
        %v846 = vadd.f32 %v750, %v845
        %847 = vdwg.mxu0
        %v848 = vand.u32 %v737, 4294901760
        %v849 = vsub.f32 %v737, %v848
        %v850 = vand.u32 %v849, 4294901760
        %v851 = vsub.f32 %v849, %v850
        %v852 = vand.u32 %v851, 4294901760
        %853 = vmatprep.subr.mxu0 %v852
        %v854 = vand.u32 %v736, 4294901760
        %v855 = vsub.f32 %v736, %v854
        %v856 = vand.u32 %v855, 4294901760
        %v857 = vsub.f32 %v855, %v856
        %v858 = vand.u32 %v857, 4294901760
        %859 = vmatpush1.msra.mxu0 %v858
        %v860 = vand.u32 %v739, 4294901760
        %v861 = vsub.f32 %v739, %v860
        %v862 = vand.u32 %v861, 4294901760
        %v863 = vsub.f32 %v861, %v862
        %v864 = vand.u32 %v863, 4294901760
        %865 = vmatprep.subr.mxu0 %v864
        %v866 = vand.u32 %v738, 4294901760
        %v867 = vsub.f32 %v738, %v866
        %v868 = vand.u32 %v867, 4294901760
        %v869 = vsub.f32 %v867, %v868
        %v870 = vand.u32 %v869, 4294901760
        %871 = vmatpush1.msra.mxu0 %v870
        %v872 = vand.u32 %v741, 4294901760
        %v873 = vsub.f32 %v741, %v872
        %v874 = vand.u32 %v873, 4294901760
        %v875 = vsub.f32 %v873, %v874
        %v876 = vand.u32 %v875, 4294901760
        %877 = vmatprep.subr.mxu0 %v876
        %v878 = vand.u32 %v740, 4294901760
        %v879 = vsub.f32 %v740, %v878
        %v880 = vand.u32 %v879, 4294901760
        %v881 = vsub.f32 %v879, %v880
        %v882 = vand.u32 %v881, 4294901760
        %883 = vmatpush1.msra.mxu0 %v882
        %v884 = vand.u32 %v743, 4294901760
        %v885 = vsub.f32 %v743, %v884
        %v886 = vand.u32 %v885, 4294901760
        %v887 = vsub.f32 %v885, %v886
        %v888 = vand.u32 %v887, 4294901760
        %889 = vmatprep.subr.mxu0 %v888
        %v890 = vand.u32 %v742, 4294901760
        %v891 = vsub.f32 %v742, %v890
        %v892 = vand.u32 %v891, 4294901760
        %v893 = vsub.f32 %v891, %v892
        %v894 = vand.u32 %v893, 4294901760
        %895 = vmatpush1.msra.mxu0 %v894
        %v896 = vand.u32 %v760, 4294901760
        %v897 = vsub.f32 %v760, %v896
        %v898 = vand.u32 %v897, 4294901760
        %v899 = vsub.f32 %v897, %v898
        %v900 = vand.u32 %v899, 4294901760
        %901 = vmatprep.subr.mxu0 %v900
        %v902 = vand.u32 %v757, 4294901760
        %v903 = vsub.f32 %v757, %v902
        %v904 = vand.u32 %v903, 4294901760
        %v905 = vsub.f32 %v903, %v904
        %v906 = vand.u32 %v905, 4294901760
        %907 = vmatpush1.msra.mxu0 %v906
        %908 = vmatprep.subr.mxu0 0.0
        %909 = vmatpush1.msra.mxu0 0.0
        %910 = vmatprep.subr.mxu0 0.0
        %911 = vmatpush1.msra.mxu0 0.0
        %912 = vmatprep.subr.mxu0 0.0
        %913 = vmatpush1.msra.mxu0 0.0
        %914 = vmatprep.subr.mxu0 0.0
        %915 = vmatpush1.msra.mxu0 0.0
        %916 = vmatprep.subr.mxu0 0.0
        %917 = vmatpush1.msra.mxu0 0.0
        %918 = vmatprep.subr.mxu0 0.0
        %919 = vmatpush1.msra.mxu0 0.0
        %920 = vmatprep.subr.mxu0 0.0
        %921 = vmatpush1.msra.mxu0 0.0
        %922 = vmatprep.subr.mxu0 0.0
        %923 = vmatpush1.msra.mxu0 0.0
        %924 = vmatprep.subr.mxu0 0.0
        %925 = vmatpush1.msra.mxu0 0.0
        %926 = vmatprep.subr.mxu0 0.0
        %927 = vmatpush1.msra.mxu0 0.0
        %928 = vmatprep.subr.mxu0 0.0
        %929 = vmatpush1.msra.mxu0 0.0
        %930 = vmatprep.subr.mxu0 0.0
        %931 = vmatpush1.msra.mxu0 0.0
        %932 = vmatprep.subr.mxu0 0.0
        %933 = vmatpush1.msra.mxu0 0.0
        %934 = vmatprep.subr.mxu0 0.0
        %935 = vmatpush1.msra.mxu0 0.0
        %936 = vmatprep.subr.mxu0 0.0
        %937 = vmatpush1.msra.mxu0 0.0
        %938 = vmatprep.subr.mxu0 0.0
        %939 = vmatpush1.msra.mxu0 0.0
        %940 = vmatprep.subr.mxu0 0.0
        %941 = vmatpush1.msra.mxu0 0.0
        %942 = vmatprep.subr.mxu0 0.0
        %943 = vmatpush1.msra.mxu0 0.0
        %944 = vmatprep.subr.mxu0 0.0
        %945 = vmatpush1.msra.mxu0 0.0
        %946 = vmatprep.subr.mxu0 0.0
        %947 = vmatpush1.msra.mxu0 0.0
        %948 = vmatprep.subr.mxu0 0.0
        %949 = vmatpush1.msra.mxu0 0.0
        %950 = vmatprep.subr.mxu0 0.0
        %951 = vmatpush1.msra.mxu0 0.0
        %952 = vmatprep.subr.mxu0 0.0
        %953 = vmatpush1.msra.mxu0 0.0
        %954 = vmatprep.subr.mxu0 0.0
        %955 = vmatpush1.msra.mxu0 0.0
        %956 = vmatprep.subr.mxu0 0.0
        %957 = vmatpush1.msra.mxu0 0.0
        %958 = vmatprep.subr.mxu0 0.0
        %959 = vmatpush1.msra.mxu0 0.0
        %960 = vmatprep.subr.mxu0 0.0
        %961 = vmatpush1.msra.mxu0 0.0
        %962 = vmatprep.mubr.f32.mxu0 0.0
        %v963 = vand.u32 %v754, 4294901760
        %964 = vmatmul.mubr.f32.gmra.mrb[0].mxu0 %v963
        %v965 = vpop.f32.mrb[0].mxu0
        %v966 = vadd.f32 %v844, %v965
        %v967 = vpop.f32.mrb[0].mxu0
        %v968 = vadd.f32 %v846, %v967
        %969 = vdwg.mxu0
        %v970 = vand.u32 %v737, 4294901760
        %v971 = vsub.f32 %v737, %v970
        %972 = vmatprep.subr.mxu0 %v971
        %v973 = vand.u32 %v736, 4294901760
        %v974 = vsub.f32 %v736, %v973
        %975 = vmatpush1.msra.mxu0 %v974
        %v976 = vand.u32 %v739, 4294901760
        %v977 = vsub.f32 %v739, %v976
        %978 = vmatprep.subr.mxu0 %v977
        %v979 = vand.u32 %v738, 4294901760
        %v980 = vsub.f32 %v738, %v979
        %981 = vmatpush1.msra.mxu0 %v980
        %v982 = vand.u32 %v741, 4294901760
        %v983 = vsub.f32 %v741, %v982
        %984 = vmatprep.subr.mxu0 %v983
        %v985 = vand.u32 %v740, 4294901760
        %v986 = vsub.f32 %v740, %v985
        %987 = vmatpush1.msra.mxu0 %v986
        %v988 = vand.u32 %v743, 4294901760
        %v989 = vsub.f32 %v743, %v988
        %990 = vmatprep.subr.mxu0 %v989
        %v991 = vand.u32 %v742, 4294901760
        %v992 = vsub.f32 %v742, %v991
        %993 = vmatpush1.msra.mxu0 %v992
        %v994 = vand.u32 %v760, 4294901760
        %v995 = vsub.f32 %v760, %v994
        %996 = vmatprep.subr.mxu0 %v995
        %v997 = vand.u32 %v757, 4294901760
        %v998 = vsub.f32 %v757, %v997
        %999 = vmatpush1.msra.mxu0 %v998
        %1000 = vmatprep.subr.mxu0 0.0
        %1001 = vmatpush1.msra.mxu0 0.0
        %1002 = vmatprep.subr.mxu0 0.0
        %1003 = vmatpush1.msra.mxu0 0.0
        %1004 = vmatprep.subr.mxu0 0.0
        %1005 = vmatpush1.msra.mxu0 0.0
        %1006 = vmatprep.subr.mxu0 0.0
        %1007 = vmatpush1.msra.mxu0 0.0
        %1008 = vmatprep.subr.mxu0 0.0
        %1009 = vmatpush1.msra.mxu0 0.0
        %1010 = vmatprep.subr.mxu0 0.0
        %1011 = vmatpush1.msra.mxu0 0.0
        %1012 = vmatprep.subr.mxu0 0.0
        %1013 = vmatpush1.msra.mxu0 0.0
        %1014 = vmatprep.subr.mxu0 0.0
        %1015 = vmatpush1.msra.mxu0 0.0
        %1016 = vmatprep.subr.mxu0 0.0
        %1017 = vmatpush1.msra.mxu0 0.0
        %1018 = vmatprep.subr.mxu0 0.0
        %1019 = vmatpush1.msra.mxu0 0.0
        %1020 = vmatprep.subr.mxu0 0.0
        %1021 = vmatpush1.msra.mxu0 0.0
        %1022 = vmatprep.subr.mxu0 0.0
        %1023 = vmatpush1.msra.mxu0 0.0
        %1024 = vmatprep.subr.mxu0 0.0
        %1025 = vmatpush1.msra.mxu0 0.0
        %1026 = vmatprep.subr.mxu0 0.0
        %1027 = vmatpush1.msra.mxu0 0.0
        %1028 = vmatprep.subr.mxu0 0.0
        %1029 = vmatpush1.msra.mxu0 0.0
        %1030 = vmatprep.subr.mxu0 0.0
        %1031 = vmatpush1.msra.mxu0 0.0
        %1032 = vmatprep.subr.mxu0 0.0
        %1033 = vmatpush1.msra.mxu0 0.0
        %1034 = vmatprep.subr.mxu0 0.0
        %1035 = vmatpush1.msra.mxu0 0.0
        %1036 = vmatprep.subr.mxu0 0.0
        %1037 = vmatpush1.msra.mxu0 0.0
        %1038 = vmatprep.subr.mxu0 0.0
        %1039 = vmatpush1.msra.mxu0 0.0
        %1040 = vmatprep.subr.mxu0 0.0
        %1041 = vmatpush1.msra.mxu0 0.0
        %1042 = vmatprep.subr.mxu0 0.0
        %1043 = vmatpush1.msra.mxu0 0.0
        %1044 = vmatprep.subr.mxu0 0.0
        %1045 = vmatpush1.msra.mxu0 0.0
        %1046 = vmatprep.subr.mxu0 0.0
        %1047 = vmatpush1.msra.mxu0 0.0
        %1048 = vmatprep.subr.mxu0 0.0
        %1049 = vmatpush1.msra.mxu0 0.0
        %1050 = vmatprep.subr.mxu0 0.0
        %1051 = vmatpush1.msra.mxu0 0.0
        %1052 = vmatprep.subr.mxu0 0.0
        %1053 = vmatpush1.msra.mxu0 0.0
        %1054 = vmatprep.mubr.f32.mxu0 0.0
        %v1055 = vand.u32 %v754, 4294901760
        %v1056 = vsub.f32 %v754, %v1055
        %1057 = vmatmul.mubr.f32.gmra.mrb[0].mxu0 %v1056
        %v1058 = vpop.f32.mrb[0].mxu0
        %v1059 = vadd.f32 %v966, %v1058
        %v1060 = vpop.f32.mrb[0].mxu0
        %v1061 = vadd.f32 %v968, %v1060
        %1062 = vdwg.mxu0
        %v1063 = vand.u32 %v737, 4294901760
        %1064 = vmatprep.subr.mxu0 %v1063
        %v1065 = vand.u32 %v736, 4294901760
        %1066 = vmatpush1.msra.mxu0 %v1065
        %v1067 = vand.u32 %v739, 4294901760
        %1068 = vmatprep.subr.mxu0 %v1067
        %v1069 = vand.u32 %v738, 4294901760
        %1070 = vmatpush1.msra.mxu0 %v1069
        %v1071 = vand.u32 %v741, 4294901760
        %1072 = vmatprep.subr.mxu0 %v1071
        %v1073 = vand.u32 %v740, 4294901760
        %1074 = vmatpush1.msra.mxu0 %v1073
        %v1075 = vand.u32 %v743, 4294901760
        %1076 = vmatprep.subr.mxu0 %v1075
        %v1077 = vand.u32 %v742, 4294901760
        %1078 = vmatpush1.msra.mxu0 %v1077
        %v1079 = vand.u32 %v760, 4294901760
        %1080 = vmatprep.subr.mxu0 %v1079
        %v1081 = vand.u32 %v757, 4294901760
        %1082 = vmatpush1.msra.mxu0 %v1081
        %1083 = vmatprep.subr.mxu0 0.0
        %1084 = vmatpush1.msra.mxu0 0.0
        %1085 = vmatprep.subr.mxu0 0.0
        %1086 = vmatpush1.msra.mxu0 0.0
        %1087 = vmatprep.subr.mxu0 0.0
        %1088 = vmatpush1.msra.mxu0 0.0
        %1089 = vmatprep.subr.mxu0 0.0
        %1090 = vmatpush1.msra.mxu0 0.0
        %1091 = vmatprep.subr.mxu0 0.0
        %1092 = vmatpush1.msra.mxu0 0.0
        %1093 = vmatprep.subr.mxu0 0.0
        %1094 = vmatpush1.msra.mxu0 0.0
        %1095 = vmatprep.subr.mxu0 0.0
        %1096 = vmatpush1.msra.mxu0 0.0
        %1097 = vmatprep.subr.mxu0 0.0
        %1098 = vmatpush1.msra.mxu0 0.0
        %1099 = vmatprep.subr.mxu0 0.0
        %1100 = vmatpush1.msra.mxu0 0.0
        %1101 = vmatprep.subr.mxu0 0.0
        %1102 = vmatpush1.msra.mxu0 0.0
        %1103 = vmatprep.subr.mxu0 0.0
        %1104 = vmatpush1.msra.mxu0 0.0
        %1105 = vmatprep.subr.mxu0 0.0
        %1106 = vmatpush1.msra.mxu0 0.0
        %1107 = vmatprep.subr.mxu0 0.0
        %1108 = vmatpush1.msra.mxu0 0.0
        %1109 = vmatprep.subr.mxu0 0.0
        %1110 = vmatpush1.msra.mxu0 0.0
        %1111 = vmatprep.subr.mxu0 0.0
        %1112 = vmatpush1.msra.mxu0 0.0
        %1113 = vmatprep.subr.mxu0 0.0
        %1114 = vmatpush1.msra.mxu0 0.0
        %1115 = vmatprep.subr.mxu0 0.0
        %1116 = vmatpush1.msra.mxu0 0.0
        %1117 = vmatprep.subr.mxu0 0.0
        %1118 = vmatpush1.msra.mxu0 0.0
        %1119 = vmatprep.subr.mxu0 0.0
        %1120 = vmatpush1.msra.mxu0 0.0
        %1121 = vmatprep.subr.mxu0 0.0
        %1122 = vmatpush1.msra.mxu0 0.0
        %1123 = vmatprep.subr.mxu0 0.0
        %1124 = vmatpush1.msra.mxu0 0.0
        %1125 = vmatprep.subr.mxu0 0.0
        %1126 = vmatpush1.msra.mxu0 0.0
        %1127 = vmatprep.subr.mxu0 0.0
        %1128 = vmatpush1.msra.mxu0 0.0
        %1129 = vmatprep.subr.mxu0 0.0
        %1130 = vmatpush1.msra.mxu0 0.0
        %1131 = vmatprep.subr.mxu0 0.0
        %1132 = vmatpush1.msra.mxu0 0.0
        %1133 = vmatprep.subr.mxu0 0.0
        %1134 = vmatpush1.msra.mxu0 0.0
        %1135 = vmatprep.subr.mxu0 0.0
        %1136 = vmatpush1.msra.mxu0 0.0
        %1137 = vmatprep.mubr.f32.mxu0 0.0
        %v1138 = vand.u32 %v754, 4294901760
        %v1139 = vsub.f32 %v754, %v1138
        %v1140 = vand.u32 %v1139, 4294901760
        %1141 = vmatmul.mubr.f32.gmra.mrb[0].mxu0 %v1140
        %v1142 = vpop.f32.mrb[0].mxu0
        %v1143 = vadd.f32 %v1059, %v1142
        %v1144 = vpop.f32.mrb[0].mxu0
        %v1145 = vadd.f32 %v1061, %v1144
        %1146 = vdwg.mxu0
        %v1147 = vand.u32 %v737, 4294901760
        %v1148 = vsub.f32 %v737, %v1147
        %v1149 = vand.u32 %v1148, 4294901760
        %1150 = vmatprep.subr.mxu0 %v1149
        %v1151 = vand.u32 %v736, 4294901760
        %v1152 = vsub.f32 %v736, %v1151
        %v1153 = vand.u32 %v1152, 4294901760
        %1154 = vmatpush1.msra.mxu0 %v1153
        %v1155 = vand.u32 %v739, 4294901760
        %v1156 = vsub.f32 %v739, %v1155
        %v1157 = vand.u32 %v1156, 4294901760
        %1158 = vmatprep.subr.mxu0 %v1157
        %v1159 = vand.u32 %v738, 4294901760
        %v1160 = vsub.f32 %v738, %v1159
        %v1161 = vand.u32 %v1160, 4294901760
        %1162 = vmatpush1.msra.mxu0 %v1161
        %v1163 = vand.u32 %v741, 4294901760
        %v1164 = vsub.f32 %v741, %v1163
        %v1165 = vand.u32 %v1164, 4294901760
        %1166 = vmatprep.subr.mxu0 %v1165
        %v1167 = vand.u32 %v740, 4294901760
        %v1168 = vsub.f32 %v740, %v1167
        %v1169 = vand.u32 %v1168, 4294901760
        %1170 = vmatpush1.msra.mxu0 %v1169
        %v1171 = vand.u32 %v743, 4294901760
        %v1172 = vsub.f32 %v743, %v1171
        %v1173 = vand.u32 %v1172, 4294901760
        %1174 = vmatprep.subr.mxu0 %v1173
        %v1175 = vand.u32 %v742, 4294901760
        %v1176 = vsub.f32 %v742, %v1175
        %v1177 = vand.u32 %v1176, 4294901760
        %1178 = vmatpush1.msra.mxu0 %v1177
        %v1179 = vand.u32 %v760, 4294901760
        %v1180 = vsub.f32 %v760, %v1179
        %v1181 = vand.u32 %v1180, 4294901760
        %1182 = vmatprep.subr.mxu0 %v1181
        %v1183 = vand.u32 %v757, 4294901760
        %v1184 = vsub.f32 %v757, %v1183
        %v1185 = vand.u32 %v1184, 4294901760
        %1186 = vmatpush1.msra.mxu0 %v1185
        %1187 = vmatprep.subr.mxu0 0.0
        %1188 = vmatpush1.msra.mxu0 0.0
        %1189 = vmatprep.subr.mxu0 0.0
        %1190 = vmatpush1.msra.mxu0 0.0
        %1191 = vmatprep.subr.mxu0 0.0
        %1192 = vmatpush1.msra.mxu0 0.0
        %1193 = vmatprep.subr.mxu0 0.0
        %1194 = vmatpush1.msra.mxu0 0.0
        %1195 = vmatprep.subr.mxu0 0.0
        %1196 = vmatpush1.msra.mxu0 0.0
        %1197 = vmatprep.subr.mxu0 0.0
        %1198 = vmatpush1.msra.mxu0 0.0
        %1199 = vmatprep.subr.mxu0 0.0
        %1200 = vmatpush1.msra.mxu0 0.0
        %1201 = vmatprep.subr.mxu0 0.0
        %1202 = vmatpush1.msra.mxu0 0.0
        %1203 = vmatprep.subr.mxu0 0.0
        %1204 = vmatpush1.msra.mxu0 0.0
        %1205 = vmatprep.subr.mxu0 0.0
        %1206 = vmatpush1.msra.mxu0 0.0
        %1207 = vmatprep.subr.mxu0 0.0
        %1208 = vmatpush1.msra.mxu0 0.0
        %1209 = vmatprep.subr.mxu0 0.0
        %1210 = vmatpush1.msra.mxu0 0.0
        %1211 = vmatprep.subr.mxu0 0.0
        %1212 = vmatpush1.msra.mxu0 0.0
        %1213 = vmatprep.subr.mxu0 0.0
        %1214 = vmatpush1.msra.mxu0 0.0
        %1215 = vmatprep.subr.mxu0 0.0
        %1216 = vmatpush1.msra.mxu0 0.0
        %1217 = vmatprep.subr.mxu0 0.0
        %1218 = vmatpush1.msra.mxu0 0.0
        %1219 = vmatprep.subr.mxu0 0.0
        %1220 = vmatpush1.msra.mxu0 0.0
        %1221 = vmatprep.subr.mxu0 0.0
        %1222 = vmatpush1.msra.mxu0 0.0
        %1223 = vmatprep.subr.mxu0 0.0
        %1224 = vmatpush1.msra.mxu0 0.0
        %1225 = vmatprep.subr.mxu0 0.0
        %1226 = vmatpush1.msra.mxu0 0.0
        %1227 = vmatprep.subr.mxu0 0.0
        %1228 = vmatpush1.msra.mxu0 0.0
        %1229 = vmatprep.subr.mxu0 0.0
        %1230 = vmatpush1.msra.mxu0 0.0
        %1231 = vmatprep.subr.mxu0 0.0
        %1232 = vmatpush1.msra.mxu0 0.0
        %1233 = vmatprep.subr.mxu0 0.0
        %1234 = vmatpush1.msra.mxu0 0.0
        %1235 = vmatprep.subr.mxu0 0.0
        %1236 = vmatpush1.msra.mxu0 0.0
        %1237 = vmatprep.subr.mxu0 0.0
        %1238 = vmatpush1.msra.mxu0 0.0
        %1239 = vmatprep.subr.mxu0 0.0
        %1240 = vmatpush1.msra.mxu0 0.0
        %1241 = vmatprep.mubr.f32.mxu0 0.0
        %v1242 = vand.u32 %v754, 4294901760
        %1243 = vmatmul.mubr.f32.gmra.mrb[0].mxu0 %v1242
        %v1244 = vpop.f32.mrb[0].mxu0
        %v1245 = vadd.f32 %v1143, %v1244
        %v1246 = vpop.f32.mrb[0].mxu0
        %v1247 = vadd.f32 %v1145, %v1246
        %1248 = vdwg.mxu0
        %v1249 = vand.u32 %v737, 4294901760
        %1250 = vmatprep.subr.mxu0 %v1249
        %v1251 = vand.u32 %v736, 4294901760
        %1252 = vmatpush1.msra.mxu0 %v1251
        %v1253 = vand.u32 %v739, 4294901760
        %1254 = vmatprep.subr.mxu0 %v1253
        %v1255 = vand.u32 %v738, 4294901760
        %1256 = vmatpush1.msra.mxu0 %v1255
        %v1257 = vand.u32 %v741, 4294901760
        %1258 = vmatprep.subr.mxu0 %v1257
        %v1259 = vand.u32 %v740, 4294901760
        %1260 = vmatpush1.msra.mxu0 %v1259
        %v1261 = vand.u32 %v743, 4294901760
        %1262 = vmatprep.subr.mxu0 %v1261
        %v1263 = vand.u32 %v742, 4294901760
        %1264 = vmatpush1.msra.mxu0 %v1263
        %v1265 = vand.u32 %v760, 4294901760
        %1266 = vmatprep.subr.mxu0 %v1265
        %v1267 = vand.u32 %v757, 4294901760
        %1268 = vmatpush1.msra.mxu0 %v1267
        %1269 = vmatprep.subr.mxu0 0.0
        %1270 = vmatpush1.msra.mxu0 0.0
        %1271 = vmatprep.subr.mxu0 0.0
        %1272 = vmatpush1.msra.mxu0 0.0
        %1273 = vmatprep.subr.mxu0 0.0
        %1274 = vmatpush1.msra.mxu0 0.0
        %1275 = vmatprep.subr.mxu0 0.0
        %1276 = vmatpush1.msra.mxu0 0.0
        %1277 = vmatprep.subr.mxu0 0.0
        %1278 = vmatpush1.msra.mxu0 0.0
        %1279 = vmatprep.subr.mxu0 0.0
        %1280 = vmatpush1.msra.mxu0 0.0
        %1281 = vmatprep.subr.mxu0 0.0
        %1282 = vmatpush1.msra.mxu0 0.0
        %1283 = vmatprep.subr.mxu0 0.0
        %1284 = vmatpush1.msra.mxu0 0.0
        %1285 = vmatprep.subr.mxu0 0.0
        %1286 = vmatpush1.msra.mxu0 0.0
        %1287 = vmatprep.subr.mxu0 0.0
        %1288 = vmatpush1.msra.mxu0 0.0
        %1289 = vmatprep.subr.mxu0 0.0
        %1290 = vmatpush1.msra.mxu0 0.0
        %1291 = vmatprep.subr.mxu0 0.0
        %1292 = vmatpush1.msra.mxu0 0.0
        %1293 = vmatprep.subr.mxu0 0.0
        %1294 = vmatpush1.msra.mxu0 0.0
        %1295 = vmatprep.subr.mxu0 0.0
        %1296 = vmatpush1.msra.mxu0 0.0
        %1297 = vmatprep.subr.mxu0 0.0
        %1298 = vmatpush1.msra.mxu0 0.0
        %1299 = vmatprep.subr.mxu0 0.0
        %1300 = vmatpush1.msra.mxu0 0.0
        %1301 = vmatprep.subr.mxu0 0.0
        %1302 = vmatpush1.msra.mxu0 0.0
        %1303 = vmatprep.subr.mxu0 0.0
        %1304 = vmatpush1.msra.mxu0 0.0
        %1305 = vmatprep.subr.mxu0 0.0
        %1306 = vmatpush1.msra.mxu0 0.0
        %1307 = vmatprep.subr.mxu0 0.0
        %1308 = vmatpush1.msra.mxu0 0.0
        %1309 = vmatprep.subr.mxu0 0.0
        %1310 = vmatpush1.msra.mxu0 0.0
        %1311 = vmatprep.subr.mxu0 0.0
        %1312 = vmatpush1.msra.mxu0 0.0
        %1313 = vmatprep.subr.mxu0 0.0
        %1314 = vmatpush1.msra.mxu0 0.0
        %1315 = vmatprep.subr.mxu0 0.0
        %1316 = vmatpush1.msra.mxu0 0.0
        %1317 = vmatprep.subr.mxu0 0.0
        %1318 = vmatpush1.msra.mxu0 0.0
        %1319 = vmatprep.subr.mxu0 0.0
        %1320 = vmatpush1.msra.mxu0 0.0
        %1321 = vmatprep.subr.mxu0 0.0
        %1322 = vmatpush1.msra.mxu0 0.0
        %1323 = vmatprep.mubr.f32.mxu0 0.0
        %v1324 = vand.u32 %v754, 4294901760
        %1325 = vmatmul.mubr.f32.gmra.mrb[0].mxu0 %v1324
        %v1326 = vpop.f32.mrb[0].mxu0
        %v1327 = vadd.f32 %v1245, %v1326
        %v1328 = vpop.f32.mrb[0].mxu0
        %v1329 = vadd.f32 %v1247, %v1328
        %1330 = vdwg.mxu0
        %v1331 = vmul.f32 %v1327, 0.70710677
        %v1332 = vmul.f32 %v1329, 0.70710677
        %v1333 = vand.u32 2147483647, %v1331
        %v1334 = vand.u32 2147483647, %v1332
        %v1335 = vmul.f32 %v1333, 0.3275911
        %v1336 = vmul.f32 %v1334, 0.3275911
        %v1337 = vadd.f32 %v1335, 1.0
        %v1338 = vadd.f32 %v1336, 1.0
        %v1339 = vrcp.pop %v1337
        %v1340 = vmul.f32 1.0, %v1339
        %v1341 = vrcp.pop %v1338
        %v1342 = vmul.f32 1.0, %v1341
        %v1343 = vmul.f32 %v1340, 1.0614054
        %v1344 = vmul.f32 %v1342, 1.0614054
        %v1345 = vsub.f32 %v1343, 1.4531521
        %v1346 = vsub.f32 %v1344, 1.4531521
        %v1347 = vmul.f32 %v1345, %v1340
        %v1348 = vmul.f32 %v1346, %v1342
        %v1349 = vadd.f32 %v1347, 1.4214138
        %v1350 = vadd.f32 %v1348, 1.4214138
        %v1351 = vmul.f32 %v1349, %v1340
        %v1352 = vmul.f32 %v1350, %v1342
        %v1353 = vsub.f32 %v1351, 0.28449672
        %v1354 = vsub.f32 %v1352, 0.28449672
        %v1355 = vmul.f32 %v1353, %v1340
        %v1356 = vmul.f32 %v1354, %v1342
        %v1357 = vadd.f32 %v1355, 0.2548296
        %v1358 = vadd.f32 %v1356, 0.2548296
        %v1359 = vmul.f32 %v1357, %v1340
        %v1360 = vmul.f32 %v1358, %v1342
        %v1361 = vsub.f32 0.0, %v1333
        %v1362 = vsub.f32 0.0, %v1334
        %v1363 = vmul.f32 %v1361, %v1333
        %v1364 = vmul.f32 %v1362, %v1334
        %v1365 = vmul.f32 %v1363, 1.442695
        %v1366 = vpow.pop %v1365
        %v1367 = vmul.f32 %v1364, 1.442695
        %v1368 = vpow.pop %v1367
        %v1369 = vmul.f32 %v1359, %v1366
        %v1370 = vmul.f32 %v1360, %v1368
        %v1371 = vsub.f32 1.0, %v1369
        %v1372 = vsub.f32 1.0, %v1370
        %vm1373 = vcmp.lt.f32.partialorder %v1331, 0.0
        %vm1374 = vcmp.lt.f32.partialorder %v1332, 0.0
        %v1375 = vsub.f32 0.0, %v1371
        %v1376 = vsub.f32 0.0, %v1372
        %v1377 = vsel %vm1373, %v1375, %v1371
        %v1378 = vsel %vm1374, %v1376, %v1372
        %v1379 = vmul.f32 %v1327, 0.5
        %v1380 = vmul.f32 %v1329, 0.5
        %v1381 = vadd.f32 %v1377, 1.0
        %v1382 = vadd.f32 %v1378, 1.0
        %v1383 = vmul.f32 %v1379, %v1381
        %v1384 = vmul.f32 %v1380, %v1382
        %v1385 = vld [vmem:[%s5] sm:$0xf]
        %v1386 = vld [vmem:[%s6] sm:$0xf]
        %1388 = vset.pattern.permute.xlu0 0
        %1389 = vperm.xlu0 %1388, %v1386
        %v1390 = vpop.permute.xlu0 %1389
        %vm1392 = vcmask 64512
        %v1394 = vsel %vm1392, %v1385, 0
        %v1396 = vand.u32 %v1384, 4294901760
        %1397 = vmatprep.subr.mxu0 %v1396
        %v1398 = vand.u32 %v1383, 4294901760
        %1399 = vmatpush1.msra.mxu0 %v1398
        %1400 = vmatprep.subr.mxu0 0.0
        %1401 = vmatpush1.msra.mxu0 0.0
        %1402 = vmatprep.subr.mxu0 0.0
        %1403 = vmatpush1.msra.mxu0 0.0
        %1404 = vmatprep.subr.mxu0 0.0
        %1405 = vmatpush1.msra.mxu0 0.0
        %1406 = vmatprep.subr.mxu0 0.0
        %1407 = vmatpush1.msra.mxu0 0.0
        %1408 = vmatprep.subr.mxu0 0.0
        %1409 = vmatpush1.msra.mxu0 0.0
        %1410 = vmatprep.subr.mxu0 0.0
        %1411 = vmatpush1.msra.mxu0 0.0
        %1412 = vmatprep.subr.mxu0 0.0
        %1413 = vmatpush1.msra.mxu0 0.0
        %1414 = vmatprep.subr.mxu0 0.0
        %1415 = vmatpush1.msra.mxu0 0.0
        %1416 = vmatprep.subr.mxu0 0.0
        %1417 = vmatpush1.msra.mxu0 0.0
        %1418 = vmatprep.subr.mxu0 0.0
        %1419 = vmatpush1.msra.mxu0 0.0
        %1420 = vmatprep.subr.mxu0 0.0
        %1421 = vmatpush1.msra.mxu0 0.0
        %1422 = vmatprep.subr.mxu0 0.0
        %1423 = vmatpush1.msra.mxu0 0.0
        %1424 = vmatprep.subr.mxu0 0.0
        %1425 = vmatpush1.msra.mxu0 0.0
        %1426 = vmatprep.subr.mxu0 0.0
        %1427 = vmatpush1.msra.mxu0 0.0
        %1428 = vmatprep.subr.mxu0 0.0
        %1429 = vmatpush1.msra.mxu0 0.0
        %1430 = vmatprep.subr.mxu0 0.0
        %1431 = vmatpush1.msra.mxu0 0.0
        %1432 = vmatprep.subr.mxu0 0.0
        %1433 = vmatpush1.msra.mxu0 0.0
        %1434 = vmatprep.subr.mxu0 0.0
        %1435 = vmatpush1.msra.mxu0 0.0
        %1436 = vmatprep.subr.mxu0 0.0
        %1437 = vmatpush1.msra.mxu0 0.0
        %1438 = vmatprep.subr.mxu0 0.0
        %1439 = vmatpush1.msra.mxu0 0.0
        %1440 = vmatprep.subr.mxu0 0.0
        %1441 = vmatpush1.msra.mxu0 0.0
        %1442 = vmatprep.subr.mxu0 0.0
        %1443 = vmatpush1.msra.mxu0 0.0
        %1444 = vmatprep.subr.mxu0 0.0
        %1445 = vmatpush1.msra.mxu0 0.0
        %1446 = vmatprep.subr.mxu0 0.0
        %1447 = vmatpush1.msra.mxu0 0.0
        %1448 = vmatprep.subr.mxu0 0.0
        %1449 = vmatpush1.msra.mxu0 0.0
        %1450 = vmatprep.subr.mxu0 0.0
        %1451 = vmatpush1.msra.mxu0 0.0
        %1452 = vmatprep.subr.mxu0 0.0
        %1453 = vmatpush1.msra.mxu0 0.0
        %1454 = vmatprep.subr.mxu0 0.0
        %1455 = vmatpush1.msra.mxu0 0.0
        %1456 = vmatprep.subr.mxu0 0.0
        %1457 = vmatpush1.msra.mxu0 0.0
        %1458 = vmatprep.subr.mxu0 0.0
        %1459 = vmatpush1.msra.mxu0 0.0
        %1460 = vmatprep.subr.mxu0 0.0
        %1461 = vmatpush1.msra.mxu0 0.0
        %1462 = vmatprep.mubr.f32.mxu0 0.0
        %v1463 = vand.u32 %v1394, 4294901760
        %v1464 = vsub.f32 %v1394, %v1463
        %v1465 = vand.u32 %v1464, 4294901760
        %v1466 = vsub.f32 %v1464, %v1465
        %v1467 = vand.u32 %v1466, 4294901760
        %1468 = vmatmul.mubr.f32.gmra.mrb[0].mxu0 %v1467
        %v1469 = vpop.f32.mrb[0].mxu0
        %v1470 = vadd.f32 %v1390, %v1469
        %v1471 = vpop.f32.mrb[0].mxu0
        %v1472 = vadd.f32 %v1390, %v1471
        %1473 = vdwg.mxu0
        %v1474 = vand.u32 %v1384, 4294901760
        %v1475 = vsub.f32 %v1384, %v1474
        %v1476 = vand.u32 %v1475, 4294901760
        %v1477 = vsub.f32 %v1475, %v1476
        %v1478 = vand.u32 %v1477, 4294901760
        %1479 = vmatprep.subr.mxu0 %v1478
        %v1480 = vand.u32 %v1383, 4294901760
        %v1481 = vsub.f32 %v1383, %v1480
        %v1482 = vand.u32 %v1481, 4294901760
        %v1483 = vsub.f32 %v1481, %v1482
        %v1484 = vand.u32 %v1483, 4294901760
        %1485 = vmatpush1.msra.mxu0 %v1484
        %1486 = vmatprep.subr.mxu0 0.0
        %1487 = vmatpush1.msra.mxu0 0.0
        %1488 = vmatprep.subr.mxu0 0.0
        %1489 = vmatpush1.msra.mxu0 0.0
        %1490 = vmatprep.subr.mxu0 0.0
        %1491 = vmatpush1.msra.mxu0 0.0
        %1492 = vmatprep.subr.mxu0 0.0
        %1493 = vmatpush1.msra.mxu0 0.0
        %1494 = vmatprep.subr.mxu0 0.0
        %1495 = vmatpush1.msra.mxu0 0.0
        %1496 = vmatprep.subr.mxu0 0.0
        %1497 = vmatpush1.msra.mxu0 0.0
        %1498 = vmatprep.subr.mxu0 0.0
        %1499 = vmatpush1.msra.mxu0 0.0
        %1500 = vmatprep.subr.mxu0 0.0
        %1501 = vmatpush1.msra.mxu0 0.0
        %1502 = vmatprep.subr.mxu0 0.0
        %1503 = vmatpush1.msra.mxu0 0.0
        %1504 = vmatprep.subr.mxu0 0.0
        %1505 = vmatpush1.msra.mxu0 0.0
        %1506 = vmatprep.subr.mxu0 0.0
        %1507 = vmatpush1.msra.mxu0 0.0
        %1508 = vmatprep.subr.mxu0 0.0
        %1509 = vmatpush1.msra.mxu0 0.0
        %1510 = vmatprep.subr.mxu0 0.0
        %1511 = vmatpush1.msra.mxu0 0.0
        %1512 = vmatprep.subr.mxu0 0.0
        %1513 = vmatpush1.msra.mxu0 0.0
        %1514 = vmatprep.subr.mxu0 0.0
        %1515 = vmatpush1.msra.mxu0 0.0
        %1516 = vmatprep.subr.mxu0 0.0
        %1517 = vmatpush1.msra.mxu0 0.0
        %1518 = vmatprep.subr.mxu0 0.0
        %1519 = vmatpush1.msra.mxu0 0.0
        %1520 = vmatprep.subr.mxu0 0.0
        %1521 = vmatpush1.msra.mxu0 0.0
        %1522 = vmatprep.subr.mxu0 0.0
        %1523 = vmatpush1.msra.mxu0 0.0
        %1524 = vmatprep.subr.mxu0 0.0
        %1525 = vmatpush1.msra.mxu0 0.0
        %1526 = vmatprep.subr.mxu0 0.0
        %1527 = vmatpush1.msra.mxu0 0.0
        %1528 = vmatprep.subr.mxu0 0.0
        %1529 = vmatpush1.msra.mxu0 0.0
        %1530 = vmatprep.subr.mxu0 0.0
        %1531 = vmatpush1.msra.mxu0 0.0
        %1532 = vmatprep.subr.mxu0 0.0
        %1533 = vmatpush1.msra.mxu0 0.0
        %1534 = vmatprep.subr.mxu0 0.0
        %1535 = vmatpush1.msra.mxu0 0.0
        %1536 = vmatprep.subr.mxu0 0.0
        %1537 = vmatpush1.msra.mxu0 0.0
        %1538 = vmatprep.subr.mxu0 0.0
        %1539 = vmatpush1.msra.mxu0 0.0
        %1540 = vmatprep.subr.mxu0 0.0
        %1541 = vmatpush1.msra.mxu0 0.0
        %1542 = vmatprep.subr.mxu0 0.0
        %1543 = vmatpush1.msra.mxu0 0.0
        %1544 = vmatprep.subr.mxu0 0.0
        %1545 = vmatpush1.msra.mxu0 0.0
        %1546 = vmatprep.subr.mxu0 0.0
        %1547 = vmatpush1.msra.mxu0 0.0
        %1548 = vmatprep.mubr.f32.mxu0 0.0
        %v1549 = vand.u32 %v1394, 4294901760
        %1550 = vmatmul.mubr.f32.gmra.mrb[0].mxu0 %v1549
        %v1551 = vpop.f32.mrb[0].mxu0
        %v1552 = vadd.f32 %v1470, %v1551
        %v1553 = vpop.f32.mrb[0].mxu0
        %v1554 = vadd.f32 %v1472, %v1553
        %1555 = vdwg.mxu0
        %v1556 = vand.u32 %v1384, 4294901760
        %v1557 = vsub.f32 %v1384, %v1556
        %1558 = vmatprep.subr.mxu0 %v1557
        %v1559 = vand.u32 %v1383, 4294901760
        %v1560 = vsub.f32 %v1383, %v1559
        %1561 = vmatpush1.msra.mxu0 %v1560
        %1562 = vmatprep.subr.mxu0 0.0
        %1563 = vmatpush1.msra.mxu0 0.0
        %1564 = vmatprep.subr.mxu0 0.0
        %1565 = vmatpush1.msra.mxu0 0.0
        %1566 = vmatprep.subr.mxu0 0.0
        %1567 = vmatpush1.msra.mxu0 0.0
        %1568 = vmatprep.subr.mxu0 0.0
        %1569 = vmatpush1.msra.mxu0 0.0
        %1570 = vmatprep.subr.mxu0 0.0
        %1571 = vmatpush1.msra.mxu0 0.0
        %1572 = vmatprep.subr.mxu0 0.0
        %1573 = vmatpush1.msra.mxu0 0.0
        %1574 = vmatprep.subr.mxu0 0.0
        %1575 = vmatpush1.msra.mxu0 0.0
        %1576 = vmatprep.subr.mxu0 0.0
        %1577 = vmatpush1.msra.mxu0 0.0
        %1578 = vmatprep.subr.mxu0 0.0
        %1579 = vmatpush1.msra.mxu0 0.0
        %1580 = vmatprep.subr.mxu0 0.0
        %1581 = vmatpush1.msra.mxu0 0.0
        %1582 = vmatprep.subr.mxu0 0.0
        %1583 = vmatpush1.msra.mxu0 0.0
        %1584 = vmatprep.subr.mxu0 0.0
        %1585 = vmatpush1.msra.mxu0 0.0
        %1586 = vmatprep.subr.mxu0 0.0
        %1587 = vmatpush1.msra.mxu0 0.0
        %1588 = vmatprep.subr.mxu0 0.0
        %1589 = vmatpush1.msra.mxu0 0.0
        %1590 = vmatprep.subr.mxu0 0.0
        %1591 = vmatpush1.msra.mxu0 0.0
        %1592 = vmatprep.subr.mxu0 0.0
        %1593 = vmatpush1.msra.mxu0 0.0
        %1594 = vmatprep.subr.mxu0 0.0
        %1595 = vmatpush1.msra.mxu0 0.0
        %1596 = vmatprep.subr.mxu0 0.0
        %1597 = vmatpush1.msra.mxu0 0.0
        %1598 = vmatprep.subr.mxu0 0.0
        %1599 = vmatpush1.msra.mxu0 0.0
        %1600 = vmatprep.subr.mxu0 0.0
        %1601 = vmatpush1.msra.mxu0 0.0
        %1602 = vmatprep.subr.mxu0 0.0
        %1603 = vmatpush1.msra.mxu0 0.0
        %1604 = vmatprep.subr.mxu0 0.0
        %1605 = vmatpush1.msra.mxu0 0.0
        %1606 = vmatprep.subr.mxu0 0.0
        %1607 = vmatpush1.msra.mxu0 0.0
        %1608 = vmatprep.subr.mxu0 0.0
        %1609 = vmatpush1.msra.mxu0 0.0
        %1610 = vmatprep.subr.mxu0 0.0
        %1611 = vmatpush1.msra.mxu0 0.0
        %1612 = vmatprep.subr.mxu0 0.0
        %1613 = vmatpush1.msra.mxu0 0.0
        %1614 = vmatprep.subr.mxu0 0.0
        %1615 = vmatpush1.msra.mxu0 0.0
        %1616 = vmatprep.subr.mxu0 0.0
        %1617 = vmatpush1.msra.mxu0 0.0
        %1618 = vmatprep.subr.mxu0 0.0
        %1619 = vmatpush1.msra.mxu0 0.0
        %1620 = vmatprep.subr.mxu0 0.0
        %1621 = vmatpush1.msra.mxu0 0.0
        %1622 = vmatprep.subr.mxu0 0.0
        %1623 = vmatpush1.msra.mxu0 0.0
        %1624 = vmatprep.mubr.f32.mxu0 0.0
        %v1625 = vand.u32 %v1394, 4294901760
        %v1626 = vsub.f32 %v1394, %v1625
        %1627 = vmatmul.mubr.f32.gmra.mrb[0].mxu0 %v1626
        %v1628 = vpop.f32.mrb[0].mxu0
        %v1629 = vadd.f32 %v1552, %v1628
        %v1630 = vpop.f32.mrb[0].mxu0
        %v1631 = vadd.f32 %v1554, %v1630
        %1632 = vdwg.mxu0
        %v1633 = vand.u32 %v1384, 4294901760
        %1634 = vmatprep.subr.mxu0 %v1633
        %v1635 = vand.u32 %v1383, 4294901760
        %1636 = vmatpush1.msra.mxu0 %v1635
        %1637 = vmatprep.subr.mxu0 0.0
        %1638 = vmatpush1.msra.mxu0 0.0
        %1639 = vmatprep.subr.mxu0 0.0
        %1640 = vmatpush1.msra.mxu0 0.0
        %1641 = vmatprep.subr.mxu0 0.0
        %1642 = vmatpush1.msra.mxu0 0.0
        %1643 = vmatprep.subr.mxu0 0.0
        %1644 = vmatpush1.msra.mxu0 0.0
        %1645 = vmatprep.subr.mxu0 0.0
        %1646 = vmatpush1.msra.mxu0 0.0
        %1647 = vmatprep.subr.mxu0 0.0
        %1648 = vmatpush1.msra.mxu0 0.0
        %1649 = vmatprep.subr.mxu0 0.0
        %1650 = vmatpush1.msra.mxu0 0.0
        %1651 = vmatprep.subr.mxu0 0.0
        %1652 = vmatpush1.msra.mxu0 0.0
        %1653 = vmatprep.subr.mxu0 0.0
        %1654 = vmatpush1.msra.mxu0 0.0
        %1655 = vmatprep.subr.mxu0 0.0
        %1656 = vmatpush1.msra.mxu0 0.0
        %1657 = vmatprep.subr.mxu0 0.0
        %1658 = vmatpush1.msra.mxu0 0.0
        %1659 = vmatprep.subr.mxu0 0.0
        %1660 = vmatpush1.msra.mxu0 0.0
        %1661 = vmatprep.subr.mxu0 0.0
        %1662 = vmatpush1.msra.mxu0 0.0
        %1663 = vmatprep.subr.mxu0 0.0
        %1664 = vmatpush1.msra.mxu0 0.0
        %1665 = vmatprep.subr.mxu0 0.0
        %1666 = vmatpush1.msra.mxu0 0.0
        %1667 = vmatprep.subr.mxu0 0.0
        %1668 = vmatpush1.msra.mxu0 0.0
        %1669 = vmatprep.subr.mxu0 0.0
        %1670 = vmatpush1.msra.mxu0 0.0
        %1671 = vmatprep.subr.mxu0 0.0
        %1672 = vmatpush1.msra.mxu0 0.0
        %1673 = vmatprep.subr.mxu0 0.0
        %1674 = vmatpush1.msra.mxu0 0.0
        %1675 = vmatprep.subr.mxu0 0.0
        %1676 = vmatpush1.msra.mxu0 0.0
        %1677 = vmatprep.subr.mxu0 0.0
        %1678 = vmatpush1.msra.mxu0 0.0
        %1679 = vmatprep.subr.mxu0 0.0
        %1680 = vmatpush1.msra.mxu0 0.0
        %1681 = vmatprep.subr.mxu0 0.0
        %1682 = vmatpush1.msra.mxu0 0.0
        %1683 = vmatprep.subr.mxu0 0.0
        %1684 = vmatpush1.msra.mxu0 0.0
        %1685 = vmatprep.subr.mxu0 0.0
        %1686 = vmatpush1.msra.mxu0 0.0
        %1687 = vmatprep.subr.mxu0 0.0
        %1688 = vmatpush1.msra.mxu0 0.0
        %1689 = vmatprep.subr.mxu0 0.0
        %1690 = vmatpush1.msra.mxu0 0.0
        %1691 = vmatprep.subr.mxu0 0.0
        %1692 = vmatpush1.msra.mxu0 0.0
        %1693 = vmatprep.subr.mxu0 0.0
        %1694 = vmatpush1.msra.mxu0 0.0
        %1695 = vmatprep.subr.mxu0 0.0
        %1696 = vmatpush1.msra.mxu0 0.0
        %1697 = vmatprep.subr.mxu0 0.0
        %1698 = vmatpush1.msra.mxu0 0.0
        %1699 = vmatprep.mubr.f32.mxu0 0.0
        %v1700 = vand.u32 %v1394, 4294901760
        %v1701 = vsub.f32 %v1394, %v1700
        %v1702 = vand.u32 %v1701, 4294901760
        %1703 = vmatmul.mubr.f32.gmra.mrb[0].mxu0 %v1702
        %v1704 = vpop.f32.mrb[0].mxu0
        %v1705 = vadd.f32 %v1629, %v1704
        %v1706 = vpop.f32.mrb[0].mxu0
        %v1707 = vadd.f32 %v1631, %v1706
        %1708 = vdwg.mxu0
        %v1709 = vand.u32 %v1384, 4294901760
        %v1710 = vsub.f32 %v1384, %v1709
        %v1711 = vand.u32 %v1710, 4294901760
        %1712 = vmatprep.subr.mxu0 %v1711
        %v1713 = vand.u32 %v1383, 4294901760
        %v1714 = vsub.f32 %v1383, %v1713
        %v1715 = vand.u32 %v1714, 4294901760
        %1716 = vmatpush1.msra.mxu0 %v1715
        %1717 = vmatprep.subr.mxu0 0.0
        %1718 = vmatpush1.msra.mxu0 0.0
        %1719 = vmatprep.subr.mxu0 0.0
        %1720 = vmatpush1.msra.mxu0 0.0
        %1721 = vmatprep.subr.mxu0 0.0
        %1722 = vmatpush1.msra.mxu0 0.0
        %1723 = vmatprep.subr.mxu0 0.0
        %1724 = vmatpush1.msra.mxu0 0.0
        %1725 = vmatprep.subr.mxu0 0.0
        %1726 = vmatpush1.msra.mxu0 0.0
        %1727 = vmatprep.subr.mxu0 0.0
        %1728 = vmatpush1.msra.mxu0 0.0
        %1729 = vmatprep.subr.mxu0 0.0
        %1730 = vmatpush1.msra.mxu0 0.0
        %1731 = vmatprep.subr.mxu0 0.0
        %1732 = vmatpush1.msra.mxu0 0.0
        %1733 = vmatprep.subr.mxu0 0.0
        %1734 = vmatpush1.msra.mxu0 0.0
        %1735 = vmatprep.subr.mxu0 0.0
        %1736 = vmatpush1.msra.mxu0 0.0
        %1737 = vmatprep.subr.mxu0 0.0
        %1738 = vmatpush1.msra.mxu0 0.0
        %1739 = vmatprep.subr.mxu0 0.0
        %1740 = vmatpush1.msra.mxu0 0.0
        %1741 = vmatprep.subr.mxu0 0.0
        %1742 = vmatpush1.msra.mxu0 0.0
        %1743 = vmatprep.subr.mxu0 0.0
        %1744 = vmatpush1.msra.mxu0 0.0
        %1745 = vmatprep.subr.mxu0 0.0
        %1746 = vmatpush1.msra.mxu0 0.0
        %1747 = vmatprep.subr.mxu0 0.0
        %1748 = vmatpush1.msra.mxu0 0.0
        %1749 = vmatprep.subr.mxu0 0.0
        %1750 = vmatpush1.msra.mxu0 0.0
        %1751 = vmatprep.subr.mxu0 0.0
        %1752 = vmatpush1.msra.mxu0 0.0
        %1753 = vmatprep.subr.mxu0 0.0
        %1754 = vmatpush1.msra.mxu0 0.0
        %1755 = vmatprep.subr.mxu0 0.0
        %1756 = vmatpush1.msra.mxu0 0.0
        %1757 = vmatprep.subr.mxu0 0.0
        %1758 = vmatpush1.msra.mxu0 0.0
        %1759 = vmatprep.subr.mxu0 0.0
        %1760 = vmatpush1.msra.mxu0 0.0
        %1761 = vmatprep.subr.mxu0 0.0
        %1762 = vmatpush1.msra.mxu0 0.0
        %1763 = vmatprep.subr.mxu0 0.0
        %1764 = vmatpush1.msra.mxu0 0.0
        %1765 = vmatprep.subr.mxu0 0.0
        %1766 = vmatpush1.msra.mxu0 0.0
        %1767 = vmatprep.subr.mxu0 0.0
        %1768 = vmatpush1.msra.mxu0 0.0
        %1769 = vmatprep.subr.mxu0 0.0
        %1770 = vmatpush1.msra.mxu0 0.0
        %1771 = vmatprep.subr.mxu0 0.0
        %1772 = vmatpush1.msra.mxu0 0.0
        %1773 = vmatprep.subr.mxu0 0.0
        %1774 = vmatpush1.msra.mxu0 0.0
        %1775 = vmatprep.subr.mxu0 0.0
        %1776 = vmatpush1.msra.mxu0 0.0
        %1777 = vmatprep.subr.mxu0 0.0
        %1778 = vmatpush1.msra.mxu0 0.0
        %1779 = vmatprep.mubr.f32.mxu0 0.0
        %v1780 = vand.u32 %v1394, 4294901760
        %1781 = vmatmul.mubr.f32.gmra.mrb[0].mxu0 %v1780
        %v1782 = vpop.f32.mrb[0].mxu0
        %v1783 = vadd.f32 %v1705, %v1782
        %v1784 = vpop.f32.mrb[0].mxu0
        %v1785 = vadd.f32 %v1707, %v1784
        %1786 = vdwg.mxu0
        %v1787 = vand.u32 %v1384, 4294901760
        %1788 = vmatprep.subr.mxu0 %v1787
        %v1789 = vand.u32 %v1383, 4294901760
        %1790 = vmatpush1.msra.mxu0 %v1789
        %1791 = vmatprep.subr.mxu0 0.0
        %1792 = vmatpush1.msra.mxu0 0.0
        %1793 = vmatprep.subr.mxu0 0.0
        %1794 = vmatpush1.msra.mxu0 0.0
        %1795 = vmatprep.subr.mxu0 0.0
        %1796 = vmatpush1.msra.mxu0 0.0
        %1797 = vmatprep.subr.mxu0 0.0
        %1798 = vmatpush1.msra.mxu0 0.0
        %1799 = vmatprep.subr.mxu0 0.0
        %1800 = vmatpush1.msra.mxu0 0.0
        %1801 = vmatprep.subr.mxu0 0.0
        %1802 = vmatpush1.msra.mxu0 0.0
        %1803 = vmatprep.subr.mxu0 0.0
        %1804 = vmatpush1.msra.mxu0 0.0
        %1805 = vmatprep.subr.mxu0 0.0
        %1806 = vmatpush1.msra.mxu0 0.0
        %1807 = vmatprep.subr.mxu0 0.0
        %1808 = vmatpush1.msra.mxu0 0.0
        %1809 = vmatprep.subr.mxu0 0.0
        %1810 = vmatpush1.msra.mxu0 0.0
        %1811 = vmatprep.subr.mxu0 0.0
        %1812 = vmatpush1.msra.mxu0 0.0
        %1813 = vmatprep.subr.mxu0 0.0
        %1814 = vmatpush1.msra.mxu0 0.0
        %1815 = vmatprep.subr.mxu0 0.0
        %1816 = vmatpush1.msra.mxu0 0.0
        %1817 = vmatprep.subr.mxu0 0.0
        %1818 = vmatpush1.msra.mxu0 0.0
        %1819 = vmatprep.subr.mxu0 0.0
        %1820 = vmatpush1.msra.mxu0 0.0
        %1821 = vmatprep.subr.mxu0 0.0
        %1822 = vmatpush1.msra.mxu0 0.0
        %1823 = vmatprep.subr.mxu0 0.0
        %1824 = vmatpush1.msra.mxu0 0.0
        %1825 = vmatprep.subr.mxu0 0.0
        %1826 = vmatpush1.msra.mxu0 0.0
        %1827 = vmatprep.subr.mxu0 0.0
        %1828 = vmatpush1.msra.mxu0 0.0
        %1829 = vmatprep.subr.mxu0 0.0
        %1830 = vmatpush1.msra.mxu0 0.0
        %1831 = vmatprep.subr.mxu0 0.0
        %1832 = vmatpush1.msra.mxu0 0.0
        %1833 = vmatprep.subr.mxu0 0.0
        %1834 = vmatpush1.msra.mxu0 0.0
        %1835 = vmatprep.subr.mxu0 0.0
        %1836 = vmatpush1.msra.mxu0 0.0
        %1837 = vmatprep.subr.mxu0 0.0
        %1838 = vmatpush1.msra.mxu0 0.0
        %1839 = vmatprep.subr.mxu0 0.0
        %1840 = vmatpush1.msra.mxu0 0.0
        %1841 = vmatprep.subr.mxu0 0.0
        %1842 = vmatpush1.msra.mxu0 0.0
        %1843 = vmatprep.subr.mxu0 0.0
        %1844 = vmatpush1.msra.mxu0 0.0
        %1845 = vmatprep.subr.mxu0 0.0
        %1846 = vmatpush1.msra.mxu0 0.0
        %1847 = vmatprep.subr.mxu0 0.0
        %1848 = vmatpush1.msra.mxu0 0.0
        %1849 = vmatprep.subr.mxu0 0.0
        %1850 = vmatpush1.msra.mxu0 0.0
        %1851 = vmatprep.subr.mxu0 0.0
        %1852 = vmatpush1.msra.mxu0 0.0
        %1853 = vmatprep.mubr.f32.mxu0 0.0
        %v1854 = vand.u32 %v1394, 4294901760
        %1855 = vmatmul.mubr.f32.gmra.mrb[0].mxu0 %v1854
        %v1856 = vpop.f32.mrb[0].mxu0
        %v1857 = vadd.f32 %v1783, %v1856
        %v1858 = vpop.f32.mrb[0].mxu0
        %v1859 = vadd.f32 %v1785, %v1858
        %1860 = vdwg.mxu0
        %v1863 = vcombine.low %v1857, %v1859
        %1865 = vst [vmem:[%s488] sm:$0xff] %v1863
        %s1866 = smul.u32 2, %s23
        %p1867 = scmp.lt.s32.totalorder %s22, 1
        %s1868 = scalar_select %p1867, %s22, 1
        %p1869 = scmp.lt.s32.totalorder %s1866, 1
        %s1870 = scalar_select %p1869, %s1866, 1
        %s1871 = smul.addr %s1868, 2
        %s1872 = sadd.s32 %s1870, %s1871
        %s1873 = smul.addr %s1872, 4
        %s1874 = scalar_lea.vmem %s7, %s1873
        // Predicated region
        $region125: #{ccm_pallas.1} parent=115 // pred_check
          %p1875 = pneg %p234
        $region126: #{ccm_pallas.1} parent=115 // pred_check_branch
          %1877 = sbr.rel (%p1875) target = $region128
        $region127: #{ccm_pallas.1} parent=115 // pred_region
          %s1878 = smul.u32 2, %s23
        $region128: #{ccm_pallas.1} parent=115 // pred_fallthru
          _
      $region116: #{ccm_pallas.1} parent=5 // pred_fallthru
        _
      %p1879 = scmp.le.s32.totalorder 2, %s13
      // Predicated region
      $region129: #{ccm_pallas.1} parent=5 // pred_check
        %p1880 = pneg %p1879
      $region130: #{ccm_pallas.1} parent=5 // pred_check_branch
        %1882 = sbr.rel (%p1880) target = $region132
      $region131: #{ccm_pallas.1} parent=5 // pred_region
        %s1883 = ssub.s32 %s13, 2
        // Predicated region
        $region133: #{ccm_pallas.1} parent=131 // pred_check
          %p1884 = pneg %p240
        $region134: #{ccm_pallas.1} parent=131 // pred_check_branch
          %1886 = sbr.rel (%p1884) target = $region136
        $region135: #{ccm_pallas.1} parent=131 // pred_region
          %s1887 = smul.u32 2, %s25
          %p1888 = scmp.lt.s32.totalorder %s24, 1
          %s1889 = scalar_select %p1888, %s24, 1
          %p1890 = scmp.lt.s32.totalorder %s1887, 1
          %s1891 = scalar_select %p1890, %s1887, 1
          %s1892 = smul.addr %s1889, 2
          %s1893 = sadd.s32 %s1891, %s1892
          %s1894 = smul.addr %s1893, 4
          %s1895 = scalar_lea.vmem %s7, %s1894
        $region136: #{ccm_pallas.1} parent=131 // pred_fallthru
          _
      $region132: #{ccm_pallas.1} parent=5 // pred_fallthru
        _
    $region6: #{ccm_pallas.1} parent=1 // loop_footer
      %s17 = sadd.s32 1, %s13
    $region7: #{ccm_pallas.1} parent=1 // loop_footer_branch
      %12 = sbr.rel target = $region3
    $region8: #{ccm_pallas.1} parent=1 // loop_exit
      _

</llo_original>
